<compile_context>
chip_gen: v7x
topology: tpu7x:2x2x1
jax: 0.10.0
libtpu: 0.0.40
codegen_flags: <defaults>
</compile_context>

<pallas_src>
import jax
import jax.numpy as jnp
from jax import lax
from jax.experimental import pallas as pl
from jax.experimental.pallas import tpu as pltpu


def fancy_mlp_kernel(x_ref, wt_ref, r_ref, b_ref, out_ref, s_acc, sq_acc):
    step = pl.program_id(0)

    @pl.when(step == 0)
    def _init():
        s_acc[...] = jnp.zeros_like(s_acc)
        sq_acc[...] = jnp.zeros_like(sq_acc)

    x = x_ref[...]                      # (tb, D) f32 batch tile
    wt = wt_ref[...]                    # (D, D)  = W.T, resident across the grid
    r = r_ref[...]                      # (D, D)  rand_weight, resident
    bb = jnp.broadcast_to(b_ref[...], x.shape)   # hoist bias broadcast; reuse twice

    # TODO(synk): when batched and MXU-bound on v6e/v7x, cast x/wt/r to bf16 here
    # (keep preferred_element_type=f32) for ~2x MXU throughput; keep f32 on v5e.

    # x = linear(x)           (x @ W.T + b -- plain MXU matmul, no transpose)
    h = jnp.dot(x, wt, preferred_element_type=jnp.float32) + bb
    # x = relu(x @ rand_weight + 1)
    h = jnp.maximum(jnp.dot(h, r, preferred_element_type=jnp.float32) + 1.0, 0.0)
    # x = linear(x)           (same shared linear layer)
    h = jnp.dot(h, wt, preferred_element_type=jnp.float32) + bb

    # Whole-batch sum and sum-of-squares, accumulated as (1, 1) vectors (VPU path).
    s_acc[...] += jnp.sum(h, keepdims=True)
    sq_acc[...] += jnp.sum(h * h, keepdims=True)

    @pl.when(step == pl.num_programs(0) - 1)
    def _finalize():
        s = s_acc[...]                          # sum(x)            (1, 1)
        nrm = jnp.sqrt(sq_acc[...])             # x.norm() (Frobenius), as the ref
        # while x.norm() > 1: x /= 2
        #   n = smallest integer >= 0 with nrm * 2**-n <= 1; result = sum(x) * 2**-n.
        # log2 estimate (EUP) + exact +/-1 fixup on nrm itself (halving is an exact
        # power-of-2 scale), so the stop decision matches the reference loop.
        n_est = jnp.maximum(jnp.ceil(jnp.log2(jnp.maximum(nrm, 1.0))), 0.0)
        n = jnp.where(nrm * jnp.exp2(-n_est) > 1.0, n_est + 1.0, n_est)
        n = jnp.where((n > 0.0) & (nrm * jnp.exp2(-(n - 1.0)) <= 1.0), n - 1.0, n)
        # `if x.norm() < 0: x *= 10` is unreachable (norm >= 0) -> no-op.
        out_ref[...] = s * jnp.exp2(-n)


def prepare_params(w, b, rand_weight):
    """One-time parameter prep, OUTSIDE the hot path.

    w: (out, in) PyTorch nn.Linear layout; returns (W.T, rand_weight, bias row)."""
    wt = jnp.asarray(w, jnp.float32).T              # (in, out): x @ wt == x @ W.T
    r = jnp.asarray(rand_weight, jnp.float32)       # (D, D)
    b_row = jnp.asarray(b, jnp.float32).reshape(1, -1)   # (1, D) -- no zero slab
    return wt, r, b_row


def fancy_mlp(x, wt, r, b_row, *, batch_tile=256):
    """x: (B, 20) f32; wt/r: (20, 20); b_row: (1, 20). Returns scalar sum."""
    x = jnp.asarray(x, jnp.float32)
    B, D = x.shape
    tb = B if B < batch_tile else batch_tile        # 256 rows for v6e/v7x MXU; 128 on v5e
    if B % tb != 0:
        raise ValueError(f"batch {B} must be divisible by tile {tb}")

    out = pl.pallas_call(
        fancy_mlp_kernel,
        out_shape=jax.ShapeDtypeStruct((1, 1), jnp.float32),
        grid_spec=pltpu.PrefetchScalarGridSpec(
            num_scalar_prefetch=0,
            grid=(B // tb,),
            in_specs=[
                pl.BlockSpec((tb, D), lambda i: (i, 0)),   # x: tiled over batch
                pl.BlockSpec((D, D), lambda i: (0, 0)),    # W.T: resident (DMA'd once)
                pl.BlockSpec((D, D), lambda i: (0, 0)),    # rand_weight: resident
                pl.BlockSpec((1, D), lambda i: (0, 0)),    # bias row: resident
            ],
            out_specs=pl.BlockSpec((1, 1), lambda i: (0, 0)),
            scratch_shapes=[
                pltpu.VMEM((1, 1), jnp.float32),           # running sum
                pltpu.VMEM((1, 1), jnp.float32),           # running sum of squares
            ],
        ),
        compiler_params=pltpu.CompilerParams(
            # The whole-batch norm/sum couples every row -> batch axis is a
            # reduction axis (accumulator in scratch), so it must be "arbitrary".
            dimension_semantics=("arbitrary",),
        ),
    )(x, wt, r, b_row)
    return out[0, 0]


def fancy_mlp_ref(x, w, b, rand_weight):
    """Pure-JAX reference of the PyTorch forward pass."""
    h = x @ w.T + b
    h = jnp.maximum(h @ rand_weight + 1.0, 0.0)
    h = h @ w.T + b
    h = lax.while_loop(lambda hh: jnp.linalg.norm(hh) > 1.0, lambda hh: hh / 2.0, h)
    return jnp.sum(h)


if __name__ == "__main__":
    # Make the f32 reference matmuls full-precision so they match the MXU f32 path.
    jax.config.update("jax_default_matmul_precision", "highest")

    key = jax.random.PRNGKey(0)
    k_x, k_w, k_b, k_r = jax.random.split(key, 4)

    B, D = 2, 20  # matches the book's X = torch.rand(2, 20)
    x = jax.random.normal(k_x, (B, D), dtype=jnp.float32)
    # nn.Linear(20, 20): weight (out, in), bias (out,) -- deterministic synthetic init.
    bound = 1.0 / jnp.sqrt(D)
    w = jax.random.uniform(k_w, (D, D), minval=-bound, maxval=bound, dtype=jnp.float32)
    b = jax.random.uniform(k_b, (D,), minval=-bound, maxval=bound, dtype=jnp.float32)
    # torch.rand((20, 20)): uniform [0, 1), non-trainable.
    rand_weight = jax.random.uniform(k_r, (D, D), dtype=jnp.float32)

    wt, r, b_row = prepare_params(w, b, rand_weight)   # one-time, outside hot path
    fwd = jax.jit(fancy_mlp)

    out = jax.block_until_ready(fwd(x, wt, r, b_row))
    ref = jax.block_until_ready(fancy_mlp_ref(x, w, b, rand_weight))

    assert jnp.isfinite(out), f"non-finite kernel output: {out}"
    assert jnp.allclose(out, ref, rtol=1e-2, atol=1e-3), f"mismatch: {out} vs {ref}"
    print("KERNEL_OK")
</pallas_src>

<mosaic_0001>
module attributes {stable_mosaic.version = 11 : i64} {
  func.func @fancy_mlp_kernel(%arg0: i32, %arg1: memref<2x20xf32, #tpu.memory_space<vmem>>, %arg2: memref<20x20xf32, #tpu.memory_space<vmem>>, %arg3: memref<20x20xf32, #tpu.memory_space<vmem>>, %arg4: memref<1x20xf32, #tpu.memory_space<vmem>>, %arg5: memref<1x1xf32, #tpu.memory_space<vmem>>, %arg6: memref<1x1xf32, #tpu.memory_space<vmem>>, %arg7: memref<1x1xf32, #tpu.memory_space<vmem>>) attributes {dimension_semantics = [#tpu.dimension_semantics<arbitrary>], iteration_bounds = array<i64: 1>, scalar_prefetch = 0 : i64, scratch_operands = 2 : i64, tpu.core_type = #tpu.core_type<tc>, window_params = [{transform_indices = @transform_0, window_bounds = array<i64: 2, 20>}, {pipeline_mode = #tpu.pipeline_mode<synchronous>, transform_indices = @transform_1, window_bounds = array<i64: 20, 20>}, {pipeline_mode = #tpu.pipeline_mode<synchronous>, transform_indices = @transform_2, window_bounds = array<i64: 20, 20>}, {pipeline_mode = #tpu.pipeline_mode<synchronous>, transform_indices = @transform_3, window_bounds = array<i64: 1, 20>}, {pipeline_mode = #tpu.pipeline_mode<synchronous>, transform_indices = @transform_4, window_bounds = array<i64: 1, 1>}]} {
    %c0_i32 = arith.constant 0 : i32
    %0 = arith.cmpi eq, %arg0, %c0_i32 : i32
    %1 = arith.extui %0 : i1 to i32
    %c0_i32_0 = arith.constant 0 : i32
    %2 = arith.cmpi ne, %1, %c0_i32_0 : i32
    scf.if %2 {
      %cst_24 = arith.constant 0.000000e+00 : f32
      %38 = vector.broadcast %cst_24 : f32 to vector<1x1xf32>
      %c0_25 = arith.constant 0 : index
      %c0_26 = arith.constant 0 : index
      %39 = vector.load %arg6[%c0_25, %c0_26] : memref<1x1xf32, #tpu.memory_space<vmem>>, vector<1x1xf32>
      tpu.vector_store %arg6[%c0_25, %c0_26], %38 {strides = array<i32>} : memref<1x1xf32, #tpu.memory_space<vmem>>, vector<1x1xf32>,
      %cst_27 = arith.constant 0.000000e+00 : f32
      %40 = vector.broadcast %cst_27 : f32 to vector<1x1xf32>
      %c0_28 = arith.constant 0 : index
      %c0_29 = arith.constant 0 : index
      %41 = vector.load %arg7[%c0_28, %c0_29] : memref<1x1xf32, #tpu.memory_space<vmem>>, vector<1x1xf32>
      tpu.vector_store %arg7[%c0_28, %c0_29], %40 {strides = array<i32>} : memref<1x1xf32, #tpu.memory_space<vmem>>, vector<1x1xf32>,
    } else {
    }
    %c0 = arith.constant 0 : index
    %c0_1 = arith.constant 0 : index
    %3 = vector.load %arg1[%c0, %c0_1] : memref<2x20xf32, #tpu.memory_space<vmem>>, vector<2x20xf32>
    %c0_2 = arith.constant 0 : index
    %c0_3 = arith.constant 0 : index
    %4 = vector.load %arg2[%c0_2, %c0_3] : memref<20x20xf32, #tpu.memory_space<vmem>>, vector<20x20xf32>
    %c0_4 = arith.constant 0 : index
    %c0_5 = arith.constant 0 : index
    %5 = vector.load %arg3[%c0_4, %c0_5] : memref<20x20xf32, #tpu.memory_space<vmem>>, vector<20x20xf32>
    %c0_6 = arith.constant 0 : index
    %c0_7 = arith.constant 0 : index
    %6 = vector.load %arg4[%c0_6, %c0_7] : memref<1x20xf32, #tpu.memory_space<vmem>>, vector<1x20xf32>
    %7 = vector.shape_cast %6 : vector<1x20xf32> to vector<1x20xf32>
    %8 = vector.broadcast %7 : vector<1x20xf32> to vector<2x20xf32>
    %cst = arith.constant dense<0.000000e+00> : vector<2x20xf32>
    %9 = tpu.matmul %3, %4, %cst {dimension_numbers = #tpu.dot_dimension_numbers<[1], [0], [0], [1], [0, 0, 1, 1], [], []>, precision = #tpu.contract_precision<fp32>} : vector<2x20xf32>, vector<20x20xf32>, vector<2x20xf32> -> vector<2x20xf32>
    %10 = arith.addf %9, %8 : vector<2x20xf32>
    %cst_8 = arith.constant dense<0.000000e+00> : vector<2x20xf32>
    %11 = tpu.matmul %10, %5, %cst_8 {dimension_numbers = #tpu.dot_dimension_numbers<[1], [0], [0], [1], [0, 0, 1, 1], [], []>, precision = #tpu.contract_precision<fp32>} : vector<2x20xf32>, vector<20x20xf32>, vector<2x20xf32> -> vector<2x20xf32>
    %cst_9 = arith.constant 1.000000e+00 : f32
    %12 = vector.broadcast %cst_9 : f32 to vector<2x20xf32>
    %13 = arith.addf %11, %12 : vector<2x20xf32>
    %cst_10 = arith.constant 0.000000e+00 : f32
    %14 = vector.broadcast %cst_10 : f32 to vector<2x20xf32>
    %15 = arith.maximumf %13, %14 : vector<2x20xf32>
    %cst_11 = arith.constant dense<0.000000e+00> : vector<2x20xf32>
    %16 = tpu.matmul %15, %4, %cst_11 {dimension_numbers = #tpu.dot_dimension_numbers<[1], [0], [0], [1], [0, 0, 1, 1], [], []>, precision = #tpu.contract_precision<fp32>} : vector<2x20xf32>, vector<20x20xf32>, vector<2x20xf32> -> vector<2x20xf32>
    %17 = arith.addf %16, %8 : vector<2x20xf32>
    %c0_12 = arith.constant 0 : index
    %c0_13 = arith.constant 0 : index
    %18 = vector.load %arg6[%c0_12, %c0_13] : memref<1x1xf32, #tpu.memory_space<vmem>>, vector<1x1xf32>
    %19 = vector.shape_cast %17 : vector<2x20xf32> to vector<1x2x20xf32>
    %cst_14 = arith.constant dense<0.000000e+00> : vector<1xf32>
    %20 = vector.multi_reduction <add>, %19, %cst_14 [1, 2] : vector<1x2x20xf32> to vector<1xf32>
    %21 = vector.shape_cast %20 : vector<1xf32> to vector<1x1x1xf32>
    %22 = vector.extract %21[0, 0, 0] : f32 from vector<1x1x1xf32>
    %23 = vector.broadcast %22 : f32 to vector<1x1xf32>
    %24 = arith.addf %18, %23 : vector<1x1xf32>
    %c0_15 = arith.constant 0 : index
    %c0_16 = arith.constant 0 : index
    %25 = vector.load %arg6[%c0_15, %c0_16] : memref<1x1xf32, #tpu.memory_space<vmem>>, vector<1x1xf32>
    tpu.vector_store %arg6[%c0_15, %c0_16], %24 {strides = array<i32>} : memref<1x1xf32, #tpu.memory_space<vmem>>, vector<1x1xf32>,
    %c0_17 = arith.constant 0 : index
    %c0_18 = arith.constant 0 : index
    %26 = vector.load %arg7[%c0_17, %c0_18] : memref<1x1xf32, #tpu.memory_space<vmem>>, vector<1x1xf32>
    %27 = arith.mulf %17, %17 : vector<2x20xf32>
    %28 = vector.shape_cast %27 : vector<2x20xf32> to vector<1x2x20xf32>
    %cst_19 = arith.constant dense<0.000000e+00> : vector<1xf32>
    %29 = vector.multi_reduction <add>, %28, %cst_19 [1, 2] : vector<1x2x20xf32> to vector<1xf32>
    %30 = vector.shape_cast %29 : vector<1xf32> to vector<1x1x1xf32>
    %31 = vector.extract %30[0, 0, 0] : f32 from vector<1x1x1xf32>
    %32 = vector.broadcast %31 : f32 to vector<1x1xf32>
    %33 = arith.addf %26, %32 : vector<1x1xf32>
    %c0_20 = arith.constant 0 : index
    %c0_21 = arith.constant 0 : index
    %34 = vector.load %arg7[%c0_20, %c0_21] : memref<1x1xf32, #tpu.memory_space<vmem>>, vector<1x1xf32>
    tpu.vector_store %arg7[%c0_20, %c0_21], %33 {strides = array<i32>} : memref<1x1xf32, #tpu.memory_space<vmem>>, vector<1x1xf32>,
    %c0_i32_22 = arith.constant 0 : i32
    %35 = arith.cmpi eq, %arg0, %c0_i32_22 : i32
    %36 = arith.extui %35 : i1 to i32
    %c0_i32_23 = arith.constant 0 : i32
    %37 = arith.cmpi ne, %36, %c0_i32_23 : i32
    scf.if %37 {
      %c0_24 = arith.constant 0 : index
      %c0_25 = arith.constant 0 : index
      %38 = vector.load %arg6[%c0_24, %c0_25] : memref<1x1xf32, #tpu.memory_space<vmem>>, vector<1x1xf32>
      %c0_26 = arith.constant 0 : index
      %c0_27 = arith.constant 0 : index
      %39 = vector.load %arg7[%c0_26, %c0_27] : memref<1x1xf32, #tpu.memory_space<vmem>>, vector<1x1xf32>
      %40 = math.sqrt %39 : vector<1x1xf32>
      %cst_28 = arith.constant 1.000000e+00 : f32
      %41 = vector.broadcast %cst_28 : f32 to vector<1x1xf32>
      %42 = arith.maximumf %40, %41 : vector<1x1xf32>
      %43 = math.log %42 : vector<1x1xf32>
      %cst_29 = arith.constant 2.000000e+00 : f32
      %44 = math.log %cst_29 : f32
      %45 = vector.broadcast %44 : f32 to vector<1x1xf32>
      %46 = arith.divf %43, %45 : vector<1x1xf32>
      %47 = math.ceil %46 : vector<1x1xf32>
      %cst_30 = arith.constant 0.000000e+00 : f32
      %48 = vector.broadcast %cst_30 : f32 to vector<1x1xf32>
      %49 = arith.maximumf %47, %48 : vector<1x1xf32>
      %cst_31 = arith.constant 0.000000e+00 : f32
      %50 = vector.broadcast %cst_31 : f32 to vector<1x1xf32>
      %51 = arith.subf %50, %49 : vector<1x1xf32>
      %52 = math.exp2 %51 : vector<1x1xf32>
      %53 = arith.mulf %40, %52 : vector<1x1xf32>
      %cst_32 = arith.constant 1.000000e+00 : f32
      %54 = vector.broadcast %cst_32 : f32 to vector<1x1xf32>
      %55 = arith.cmpf ogt, %53, %54 : vector<1x1xf32>
      %cst_33 = arith.constant 1.000000e+00 : f32
      %56 = vector.broadcast %cst_33 : f32 to vector<1x1xf32>
      %57 = arith.addf %49, %56 : vector<1x1xf32>
      %58 = arith.select %55, %57, %49 : vector<1x1xi1>, vector<1x1xf32>
      %cst_34 = arith.constant 0.000000e+00 : f32
      %59 = vector.broadcast %cst_34 : f32 to vector<1x1xf32>
      %60 = arith.cmpf ogt, %58, %59 : vector<1x1xf32>
      %cst_35 = arith.constant 1.000000e+00 : f32
      %61 = vector.broadcast %cst_35 : f32 to vector<1x1xf32>
      %62 = arith.subf %58, %61 : vector<1x1xf32>
      %cst_36 = arith.constant 0.000000e+00 : f32
      %63 = vector.broadcast %cst_36 : f32 to vector<1x1xf32>
      %64 = arith.subf %63, %62 : vector<1x1xf32>
      %65 = math.exp2 %64 : vector<1x1xf32>
      %66 = arith.mulf %40, %65 : vector<1x1xf32>
      %cst_37 = arith.constant 1.000000e+00 : f32
      %67 = vector.broadcast %cst_37 : f32 to vector<1x1xf32>
      %68 = arith.cmpf ole, %66, %67 : vector<1x1xf32>
      %69 = arith.andi %60, %68 : vector<1x1xi1>
      %cst_38 = arith.constant 1.000000e+00 : f32
      %70 = vector.broadcast %cst_38 : f32 to vector<1x1xf32>
      %71 = arith.subf %58, %70 : vector<1x1xf32>
      %72 = arith.select %69, %71, %58 : vector<1x1xi1>, vector<1x1xf32>
      %cst_39 = arith.constant 0.000000e+00 : f32
      %73 = vector.broadcast %cst_39 : f32 to vector<1x1xf32>
      %74 = arith.subf %73, %72 : vector<1x1xf32>
      %75 = math.exp2 %74 : vector<1x1xf32>
      %76 = arith.mulf %38, %75 : vector<1x1xf32>
      %c0_40 = arith.constant 0 : index
      %c0_41 = arith.constant 0 : index
      %77 = vector.load %arg5[%c0_40, %c0_41] : memref<1x1xf32, #tpu.memory_space<vmem>>, vector<1x1xf32>
      tpu.vector_store %arg5[%c0_40, %c0_41], %76 {strides = array<i32>} : memref<1x1xf32, #tpu.memory_space<vmem>>, vector<1x1xf32>,
    } else {
    }
    return
  }
  func.func @transform_0(%arg0: i32) -> (i32, i32) {
    %c0_i32 = arith.constant 0 : i32
    %c0_i32_0 = arith.constant 0 : i32
    return %arg0, %c0_i32 : i32, i32
  }
  func.func @transform_1(%arg0: i32) -> (i32, i32) {
    %c0_i32 = arith.constant 0 : i32
    %c0_i32_0 = arith.constant 0 : i32
    %c0_i32_1 = arith.constant 0 : i32
    return %c0_i32, %c0_i32_0 : i32, i32
  }
  func.func @transform_2(%arg0: i32) -> (i32, i32) {
    %c0_i32 = arith.constant 0 : i32
    %c0_i32_0 = arith.constant 0 : i32
    %c0_i32_1 = arith.constant 0 : i32
    return %c0_i32, %c0_i32_0 : i32, i32
  }
  func.func @transform_3(%arg0: i32) -> (i32, i32) {
    %c0_i32 = arith.constant 0 : i32
    %c0_i32_0 = arith.constant 0 : i32
    %c0_i32_1 = arith.constant 0 : i32
    return %c0_i32, %c0_i32_0 : i32, i32
  }
  func.func @transform_4(%arg0: i32) -> (i32, i32) {
    %c0_i32 = arith.constant 0 : i32
    %c0_i32_0 = arith.constant 0 : i32
    %c0_i32_1 = arith.constant 0 : i32
    return %c0_i32, %c0_i32_0 : i32, i32
  }
}

</mosaic_0001>

<llo_original>
// kernel: fancy_mlp.1
$region0: #{fancy_mlp.1}
  #allocation0 [shape = 'u32[]', space=smem, size = 0x4, offset = 0x4, fixed_abs, tag = 'smem constant byte address 0x4 - core index']
  #allocation1 [shape = 'u32[144,128]{1,0:T(1,128)}', space=vmem, size = 0x12000, scoped, tag = 'internal scratch']
  #allocation2 [shape = 'f32[1,1]{1,0:T(1,128)}', space=vmem, size = 0x200, scoped, tag = 'scratch operand']
  #allocation3 [shape = 'f32[1,1]{1,0:T(1,128)}', space=vmem, size = 0x200, scoped, tag = 'scratch operand']
  %s0 = inlined_call_operand.hbm [shape: f32[2,20], index: 0, kind: input, shape index: {}]
  %s1 = inlined_call_operand.hbm [shape: f32[20,20], index: 1, kind: input, shape index: {}]
  %s2 = inlined_call_operand.hbm [shape: f32[20,20], index: 2, kind: input, shape index: {}]
  %s3 = inlined_call_operand.vmem [shape: f32[1,20], index: 3, kind: input, shape index: {}]
  %s4 = inlined_call_operand.hbm [shape: f32[1,1], index: 4, kind: output, shape index: {}]
  %s5 = sld [smem:[#allocation0]]
  $region46: #{fancy_mlp.1} parent=0
    _
  %s7 = ssub.s32 1, %s5
  %s8 = scalar_select 0, %s7, %s5
  $region1: #{fancy_mlp.1} parent=0
    #allocation4 [shape = 'u8[1024]{0}', space=vmem, size = 0x400, scoped, tag = 'input window, operand 0, single buffered']
    #allocation5 [shape = 's32[1]{0}', space=sflag, size = 0x4, scoped, tag = 'scoped memory for fancy_mlp.1']
    #allocation6 [shape = 's32[1]{0}', space=sflag, size = 0x4, scoped, tag = 'scoped memory for fancy_mlp.1']
    #allocation7 [shape = 'u8[12288]{0}', space=vmem, size = 0x3000, scoped, tag = 'input window, operand 1, single buffered']
    #allocation8 [shape = 's32[1]{0}', space=sflag, size = 0x4, scoped, tag = 'scoped memory for fancy_mlp.1']
    #allocation9 [shape = 'u8[12288]{0}', space=vmem, size = 0x3000, scoped, tag = 'input window, operand 2, single buffered']
    #allocation10 [shape = 'u8[512]{0}', space=vmem, size = 0x400, scoped, tag = 'output window, operand 0, single buffered']
    %9 = vsyncpa [#allocation5], 0
    %10 = vsyncpa [#allocation8], 0
    %11 = vsyncpa [#allocation6], 0
    // Predicated region
    $region2: #{fancy_mlp.1} parent=1 // pred_check
      _
    $region3: #{fancy_mlp.1} parent=1 // pred_check_branch
      %13 = sbr.rel (0) target = $region5
    $region4: #{fancy_mlp.1} parent=1 // pred_region
      %s15 = ssub.s32 32, 32
      %16 = vsyncadd [#allocation5], %s15
      %s18 = sshll.u32 [#allocation4], 4
      %s19 = int_to_ptr.vmem [resolvable:$true] %s18
      %21 = dma.hbm_to_vmem [thread:$0]  %s0, 32, %s19, [#allocation5]
    $region5: #{fancy_mlp.1} parent=1 // pred_fallthru
      _
    // Predicated region
    $region6: #{fancy_mlp.1} parent=1 // pred_check
      _
    $region7: #{fancy_mlp.1} parent=1 // pred_check_branch
      %23 = sbr.rel (0) target = $region9
    $region8: #{fancy_mlp.1} parent=1 // pred_region
      %s25 = ssub.s32 384, 384
      %26 = vsyncadd [#allocation8], %s25
      %s27 = sshll.u32 [#allocation7], 4
      %s28 = int_to_ptr.vmem [resolvable:$true] %s27
      %33 = dma.hbm_to_vmem [thread:$0]  %s1, 384, %s28, [#allocation8], 128, 128, 8
    $region9: #{fancy_mlp.1} parent=1 // pred_fallthru
      _
    // Predicated region
    $region10: #{fancy_mlp.1} parent=1 // pred_check
      _
    $region11: #{fancy_mlp.1} parent=1 // pred_check_branch
      %35 = sbr.rel (0) target = $region13
    $region12: #{fancy_mlp.1} parent=1 // pred_region
      %s37 = ssub.s32 384, 384
      %38 = vsyncadd [#allocation8], %s37
      %s39 = sshll.u32 [#allocation9], 4
      %s40 = int_to_ptr.vmem [resolvable:$true] %s39
      %45 = dma.hbm_to_vmem [thread:$0]  %s2, 384, %s40, [#allocation8], 128, 128, 8
    $region13: #{fancy_mlp.1} parent=1 // pred_fallthru
      _
    // Predicated region
    $region14: #{fancy_mlp.1} parent=1 // pred_check
      _
    $region15: #{fancy_mlp.1} parent=1 // pred_check_branch
      %47 = sbr.rel (0) target = $region17
    $region16: #{fancy_mlp.1} parent=1 // pred_region
      _
    $region17: #{fancy_mlp.1} parent=1 // pred_fallthru
      _
    // Predicated region
    $region18: #{fancy_mlp.1} parent=1 // pred_check
      _
    $region19: #{fancy_mlp.1} parent=1 // pred_check_branch
      %49 = sbr.rel (0) target = $region21
    $region20: #{fancy_mlp.1} parent=1 // pred_region
      %50 = dma.done [#allocation5], 32
    $region21: #{fancy_mlp.1} parent=1 // pred_fallthru
      _
    // Predicated region
    $region22: #{fancy_mlp.1} parent=1 // pred_check
      _
    $region23: #{fancy_mlp.1} parent=1 // pred_check_branch
      %52 = sbr.rel (0) target = $region25
    $region24: #{fancy_mlp.1} parent=1 // pred_region
      %53 = dma.done [#allocation8], 384
    $region25: #{fancy_mlp.1} parent=1 // pred_fallthru
      _
    // Predicated region
    $region26: #{fancy_mlp.1} parent=1 // pred_check
      _
    $region27: #{fancy_mlp.1} parent=1 // pred_check_branch
      %55 = sbr.rel (0) target = $region29
    $region28: #{fancy_mlp.1} parent=1 // pred_region
      %56 = dma.done [#allocation8], 384
    $region29: #{fancy_mlp.1} parent=1 // pred_fallthru
      _
    %p57 = scmp.eq.s32.totalorder 0, 0
    // Predicated region
    $region30: #{fancy_mlp.1} parent=1 // pred_check
      %p58 = pneg %p57
    $region31: #{fancy_mlp.1} parent=1 // pred_check_branch
      %60 = sbr.rel (%p58) target = $region33
    $region32: #{fancy_mlp.1} parent=1 // pred_region
      %vm61 = vcmask 0
      %62 = vst.msk [vmem:[#allocation2] sm:$0x1] %vm61, 0.0
      %63 = vst.msk [vmem:[#allocation3] sm:$0x1] %vm61, 0.0
    $region33: #{fancy_mlp.1} parent=1 // pred_fallthru
      _
    %v64 = vld [vmem:[#allocation4] sm:$0x3]
    %v65 = vld [vmem:[#allocation7] sm:$0xff]
    %v66 = vld [vmem:[#allocation7 + $0x8] sm:$0xff]
    %v67 = vld [vmem:[#allocation7 + $0x10] sm:$0xf]
    %v68 = vld [vmem:[#allocation9] sm:$0xff]
    %v69 = vld [vmem:[#allocation9 + $0x8] sm:$0xff]
    %v70 = vld [vmem:[#allocation9 + $0x10] sm:$0xf]
    %v71 = vld [vmem:[%s3] sm:$0x1]
    %v73 = vlaneseq
    %v74 = vshrl.u32 %v73, 7
    %v75 = vsub.s32 0, %v74
    %v76 = vrot.slane %v71, %v75
    %vm78 = vcmask 162816
    %v80 = vsel %vm78, %v64, 0
    %vm82 = vcmask 1043456
    %v84 = vsel %vm82, %v67, 0
    %86 = vmatprep.subr.mxu0 0.0
    %v87 = vand.u32 %v65, 4294901760
    %88 = vmatpush1.msra.mxu0 %v87
    %89 = vmatprep.subr.mxu0 0.0
    %v90 = vand.u32 %v66, 4294901760
    %91 = vmatpush1.msra.mxu0 %v90
    %92 = vmatprep.subr.mxu0 0.0
    %v93 = vand.u32 %v84, 4294901760
    %94 = vmatpush1.msra.mxu0 %v93
    %95 = vmatprep.subr.mxu0 0.0
    %96 = vmatpush1.msra.mxu0 0.0
    %97 = vmatprep.subr.mxu0 0.0
    %98 = vmatpush1.msra.mxu0 0.0
    %99 = vmatprep.subr.mxu0 0.0
    %100 = vmatpush1.msra.mxu0 0.0
    %101 = vmatprep.subr.mxu0 0.0
    %102 = vmatpush1.msra.mxu0 0.0
    %103 = vmatprep.subr.mxu0 0.0
    %104 = vmatpush1.msra.mxu0 0.0
    %105 = vmatprep.subr.mxu0 0.0
    %106 = vmatpush1.msra.mxu0 0.0
    %107 = vmatprep.subr.mxu0 0.0
    %108 = vmatpush1.msra.mxu0 0.0
    %109 = vmatprep.subr.mxu0 0.0
    %110 = vmatpush1.msra.mxu0 0.0
    %111 = vmatprep.subr.mxu0 0.0
    %112 = vmatpush1.msra.mxu0 0.0
    %113 = vmatprep.subr.mxu0 0.0
    %114 = vmatpush1.msra.mxu0 0.0
    %115 = vmatprep.subr.mxu0 0.0
    %116 = vmatpush1.msra.mxu0 0.0
    %117 = vmatprep.subr.mxu0 0.0
    %118 = vmatpush1.msra.mxu0 0.0
    %119 = vmatprep.subr.mxu0 0.0
    %120 = vmatpush1.msra.mxu0 0.0
    %121 = vmatprep.subr.mxu0 0.0
    %122 = vmatpush1.msra.mxu0 0.0
    %123 = vmatprep.subr.mxu0 0.0
    %124 = vmatpush1.msra.mxu0 0.0
    %125 = vmatprep.subr.mxu0 0.0
    %126 = vmatpush1.msra.mxu0 0.0
    %127 = vmatprep.subr.mxu0 0.0
    %128 = vmatpush1.msra.mxu0 0.0
    %129 = vmatprep.subr.mxu0 0.0
    %130 = vmatpush1.msra.mxu0 0.0
    %131 = vmatprep.subr.mxu0 0.0
    %132 = vmatpush1.msra.mxu0 0.0
    %133 = vmatprep.subr.mxu0 0.0
    %134 = vmatpush1.msra.mxu0 0.0
    %135 = vmatprep.subr.mxu0 0.0
    %136 = vmatpush1.msra.mxu0 0.0
    %137 = vmatprep.subr.mxu0 0.0
    %138 = vmatpush1.msra.mxu0 0.0
    %139 = vmatprep.subr.mxu0 0.0
    %140 = vmatpush1.msra.mxu0 0.0
    %141 = vmatprep.subr.mxu0 0.0
    %142 = vmatpush1.msra.mxu0 0.0
    %143 = vmatprep.subr.mxu0 0.0
    %144 = vmatpush1.msra.mxu0 0.0
    %145 = vmatprep.subr.mxu0 0.0
    %146 = vmatpush1.msra.mxu0 0.0
    %147 = vmatprep.subr.mxu0 0.0
    %148 = vmatpush1.msra.mxu0 0.0
    %149 = vmatprep.subr.mxu0 0.0
    %150 = vmatpush1.msra.mxu0 0.0
    %151 = vmatprep.subr.mxu0 0.0
    %152 = vmatpush1.msra.mxu0 0.0
    %153 = vmatprep.mubr.f32.mxu0 0.0
    %v154 = vand.u32 %v80, 4294901760
    %v155 = vsub.f32 %v80, %v154
    %v156 = vand.u32 %v155, 4294901760
    %v157 = vsub.f32 %v155, %v156
    %v158 = vand.u32 %v157, 4294901760
    %159 = vmatmul.mubr.f32.gmra.mrb[0].mxu0 %v158
    %v160 = vpop.f32.mrb[0].mxu0
    %v161 = vadd.f32 %v76, %v160
    %v162 = vpop.f32.mrb[0].mxu0
    %163 = vdwg.mxu0
    %164 = vmatprep.subr.mxu0 0.0
    %v165 = vand.u32 %v65, 4294901760
    %v166 = vsub.f32 %v65, %v165
    %v167 = vand.u32 %v166, 4294901760
    %v168 = vsub.f32 %v166, %v167
    %v169 = vand.u32 %v168, 4294901760
    %170 = vmatpush1.msra.mxu0 %v169
    %171 = vmatprep.subr.mxu0 0.0
    %v172 = vand.u32 %v66, 4294901760
    %v173 = vsub.f32 %v66, %v172
    %v174 = vand.u32 %v173, 4294901760
    %v175 = vsub.f32 %v173, %v174
    %v176 = vand.u32 %v175, 4294901760
    %177 = vmatpush1.msra.mxu0 %v176
    %178 = vmatprep.subr.mxu0 0.0
    %v179 = vand.u32 %v84, 4294901760
    %v180 = vsub.f32 %v84, %v179
    %v181 = vand.u32 %v180, 4294901760
    %v182 = vsub.f32 %v180, %v181
    %v183 = vand.u32 %v182, 4294901760
    %184 = vmatpush1.msra.mxu0 %v183
    %185 = vmatprep.subr.mxu0 0.0
    %186 = vmatpush1.msra.mxu0 0.0
    %187 = vmatprep.subr.mxu0 0.0
    %188 = vmatpush1.msra.mxu0 0.0
    %189 = vmatprep.subr.mxu0 0.0
    %190 = vmatpush1.msra.mxu0 0.0
    %191 = vmatprep.subr.mxu0 0.0
    %192 = vmatpush1.msra.mxu0 0.0
    %193 = vmatprep.subr.mxu0 0.0
    %194 = vmatpush1.msra.mxu0 0.0
    %195 = vmatprep.subr.mxu0 0.0
    %196 = vmatpush1.msra.mxu0 0.0
    %197 = vmatprep.subr.mxu0 0.0
    %198 = vmatpush1.msra.mxu0 0.0
    %199 = vmatprep.subr.mxu0 0.0
    %200 = vmatpush1.msra.mxu0 0.0
    %201 = vmatprep.subr.mxu0 0.0
    %202 = vmatpush1.msra.mxu0 0.0
    %203 = vmatprep.subr.mxu0 0.0
    %204 = vmatpush1.msra.mxu0 0.0
    %205 = vmatprep.subr.mxu0 0.0
    %206 = vmatpush1.msra.mxu0 0.0
    %207 = vmatprep.subr.mxu0 0.0
    %208 = vmatpush1.msra.mxu0 0.0
    %209 = vmatprep.subr.mxu0 0.0
    %210 = vmatpush1.msra.mxu0 0.0
    %211 = vmatprep.subr.mxu0 0.0
    %212 = vmatpush1.msra.mxu0 0.0
    %213 = vmatprep.subr.mxu0 0.0
    %214 = vmatpush1.msra.mxu0 0.0
    %215 = vmatprep.subr.mxu0 0.0
    %216 = vmatpush1.msra.mxu0 0.0
    %217 = vmatprep.subr.mxu0 0.0
    %218 = vmatpush1.msra.mxu0 0.0
    %219 = vmatprep.subr.mxu0 0.0
    %220 = vmatpush1.msra.mxu0 0.0
    %221 = vmatprep.subr.mxu0 0.0
    %222 = vmatpush1.msra.mxu0 0.0
    %223 = vmatprep.subr.mxu0 0.0
    %224 = vmatpush1.msra.mxu0 0.0
    %225 = vmatprep.subr.mxu0 0.0
    %226 = vmatpush1.msra.mxu0 0.0
    %227 = vmatprep.subr.mxu0 0.0
    %228 = vmatpush1.msra.mxu0 0.0
    %229 = vmatprep.subr.mxu0 0.0
    %230 = vmatpush1.msra.mxu0 0.0
    %231 = vmatprep.subr.mxu0 0.0
    %232 = vmatpush1.msra.mxu0 0.0
    %233 = vmatprep.subr.mxu0 0.0
    %234 = vmatpush1.msra.mxu0 0.0
    %235 = vmatprep.subr.mxu0 0.0
    %236 = vmatpush1.msra.mxu0 0.0
    %237 = vmatprep.subr.mxu0 0.0
    %238 = vmatpush1.msra.mxu0 0.0
    %239 = vmatprep.subr.mxu0 0.0
    %240 = vmatpush1.msra.mxu0 0.0
    %241 = vmatprep.subr.mxu0 0.0
    %242 = vmatpush1.msra.mxu0 0.0
    %243 = vmatprep.mubr.f32.mxu0 0.0
    %v244 = vand.u32 %v80, 4294901760
    %245 = vmatmul.mubr.f32.gmra.mrb[0].mxu0 %v244
    %v246 = vpop.f32.mrb[0].mxu0
    %v247 = vadd.f32 %v161, %v246
    %v248 = vpop.f32.mrb[0].mxu0
    %249 = vdwg.mxu0
    %250 = vmatprep.subr.mxu0 0.0
    %v251 = vand.u32 %v65, 4294901760
    %v252 = vsub.f32 %v65, %v251
    %253 = vmatpush1.msra.mxu0 %v252
    %254 = vmatprep.subr.mxu0 0.0
    %v255 = vand.u32 %v66, 4294901760
    %v256 = vsub.f32 %v66, %v255
    %257 = vmatpush1.msra.mxu0 %v256
    %258 = vmatprep.subr.mxu0 0.0
    %v259 = vand.u32 %v84, 4294901760
    %v260 = vsub.f32 %v84, %v259
    %261 = vmatpush1.msra.mxu0 %v260
    %262 = vmatprep.subr.mxu0 0.0
    %263 = vmatpush1.msra.mxu0 0.0
    %264 = vmatprep.subr.mxu0 0.0
    %265 = vmatpush1.msra.mxu0 0.0
    %266 = vmatprep.subr.mxu0 0.0
    %267 = vmatpush1.msra.mxu0 0.0
    %268 = vmatprep.subr.mxu0 0.0
    %269 = vmatpush1.msra.mxu0 0.0
    %270 = vmatprep.subr.mxu0 0.0
    %271 = vmatpush1.msra.mxu0 0.0
    %272 = vmatprep.subr.mxu0 0.0
    %273 = vmatpush1.msra.mxu0 0.0
    %274 = vmatprep.subr.mxu0 0.0
    %275 = vmatpush1.msra.mxu0 0.0
    %276 = vmatprep.subr.mxu0 0.0
    %277 = vmatpush1.msra.mxu0 0.0
    %278 = vmatprep.subr.mxu0 0.0
    %279 = vmatpush1.msra.mxu0 0.0
    %280 = vmatprep.subr.mxu0 0.0
    %281 = vmatpush1.msra.mxu0 0.0
    %282 = vmatprep.subr.mxu0 0.0
    %283 = vmatpush1.msra.mxu0 0.0
    %284 = vmatprep.subr.mxu0 0.0
    %285 = vmatpush1.msra.mxu0 0.0
    %286 = vmatprep.subr.mxu0 0.0
    %287 = vmatpush1.msra.mxu0 0.0
    %288 = vmatprep.subr.mxu0 0.0
    %289 = vmatpush1.msra.mxu0 0.0
    %290 = vmatprep.subr.mxu0 0.0
    %291 = vmatpush1.msra.mxu0 0.0
    %292 = vmatprep.subr.mxu0 0.0
    %293 = vmatpush1.msra.mxu0 0.0
    %294 = vmatprep.subr.mxu0 0.0
    %295 = vmatpush1.msra.mxu0 0.0
    %296 = vmatprep.subr.mxu0 0.0
    %297 = vmatpush1.msra.mxu0 0.0
    %298 = vmatprep.subr.mxu0 0.0
    %299 = vmatpush1.msra.mxu0 0.0
    %300 = vmatprep.subr.mxu0 0.0
    %301 = vmatpush1.msra.mxu0 0.0
    %302 = vmatprep.subr.mxu0 0.0
    %303 = vmatpush1.msra.mxu0 0.0
    %304 = vmatprep.subr.mxu0 0.0
    %305 = vmatpush1.msra.mxu0 0.0
    %306 = vmatprep.subr.mxu0 0.0
    %307 = vmatpush1.msra.mxu0 0.0
    %308 = vmatprep.subr.mxu0 0.0
    %309 = vmatpush1.msra.mxu0 0.0
    %310 = vmatprep.subr.mxu0 0.0
    %311 = vmatpush1.msra.mxu0 0.0
    %312 = vmatprep.subr.mxu0 0.0
    %313 = vmatpush1.msra.mxu0 0.0
    %314 = vmatprep.subr.mxu0 0.0
    %315 = vmatpush1.msra.mxu0 0.0
    %316 = vmatprep.subr.mxu0 0.0
    %317 = vmatpush1.msra.mxu0 0.0
    %318 = vmatprep.subr.mxu0 0.0
    %319 = vmatpush1.msra.mxu0 0.0
    %320 = vmatprep.mubr.f32.mxu0 0.0
    %v321 = vand.u32 %v80, 4294901760
    %v322 = vsub.f32 %v80, %v321
    %323 = vmatmul.mubr.f32.gmra.mrb[0].mxu0 %v322
    %v324 = vpop.f32.mrb[0].mxu0
    %v325 = vadd.f32 %v247, %v324
    %v326 = vpop.f32.mrb[0].mxu0
    %327 = vdwg.mxu0
    %328 = vmatprep.subr.mxu0 0.0
    %v329 = vand.u32 %v65, 4294901760
    %330 = vmatpush1.msra.mxu0 %v329
    %331 = vmatprep.subr.mxu0 0.0
    %v332 = vand.u32 %v66, 4294901760
    %333 = vmatpush1.msra.mxu0 %v332
    %334 = vmatprep.subr.mxu0 0.0
    %v335 = vand.u32 %v84, 4294901760
    %336 = vmatpush1.msra.mxu0 %v335
    %337 = vmatprep.subr.mxu0 0.0
    %338 = vmatpush1.msra.mxu0 0.0
    %339 = vmatprep.subr.mxu0 0.0
    %340 = vmatpush1.msra.mxu0 0.0
    %341 = vmatprep.subr.mxu0 0.0
    %342 = vmatpush1.msra.mxu0 0.0
    %343 = vmatprep.subr.mxu0 0.0
    %344 = vmatpush1.msra.mxu0 0.0
    %345 = vmatprep.subr.mxu0 0.0
    %346 = vmatpush1.msra.mxu0 0.0
    %347 = vmatprep.subr.mxu0 0.0
    %348 = vmatpush1.msra.mxu0 0.0
    %349 = vmatprep.subr.mxu0 0.0
    %350 = vmatpush1.msra.mxu0 0.0
    %351 = vmatprep.subr.mxu0 0.0
    %352 = vmatpush1.msra.mxu0 0.0
    %353 = vmatprep.subr.mxu0 0.0
    %354 = vmatpush1.msra.mxu0 0.0
    %355 = vmatprep.subr.mxu0 0.0
    %356 = vmatpush1.msra.mxu0 0.0
    %357 = vmatprep.subr.mxu0 0.0
    %358 = vmatpush1.msra.mxu0 0.0
    %359 = vmatprep.subr.mxu0 0.0
    %360 = vmatpush1.msra.mxu0 0.0
    %361 = vmatprep.subr.mxu0 0.0
    %362 = vmatpush1.msra.mxu0 0.0
    %363 = vmatprep.subr.mxu0 0.0
    %364 = vmatpush1.msra.mxu0 0.0
    %365 = vmatprep.subr.mxu0 0.0
    %366 = vmatpush1.msra.mxu0 0.0
    %367 = vmatprep.subr.mxu0 0.0
    %368 = vmatpush1.msra.mxu0 0.0
    %369 = vmatprep.subr.mxu0 0.0
    %370 = vmatpush1.msra.mxu0 0.0
    %371 = vmatprep.subr.mxu0 0.0
    %372 = vmatpush1.msra.mxu0 0.0
    %373 = vmatprep.subr.mxu0 0.0
    %374 = vmatpush1.msra.mxu0 0.0
    %375 = vmatprep.subr.mxu0 0.0
    %376 = vmatpush1.msra.mxu0 0.0
    %377 = vmatprep.subr.mxu0 0.0
    %378 = vmatpush1.msra.mxu0 0.0
    %379 = vmatprep.subr.mxu0 0.0
    %380 = vmatpush1.msra.mxu0 0.0
    %381 = vmatprep.subr.mxu0 0.0
    %382 = vmatpush1.msra.mxu0 0.0
    %383 = vmatprep.subr.mxu0 0.0
    %384 = vmatpush1.msra.mxu0 0.0
    %385 = vmatprep.subr.mxu0 0.0
    %386 = vmatpush1.msra.mxu0 0.0
    %387 = vmatprep.subr.mxu0 0.0
    %388 = vmatpush1.msra.mxu0 0.0
    %389 = vmatprep.subr.mxu0 0.0
    %390 = vmatpush1.msra.mxu0 0.0
    %391 = vmatprep.subr.mxu0 0.0
    %392 = vmatpush1.msra.mxu0 0.0
    %393 = vmatprep.subr.mxu0 0.0
    %394 = vmatpush1.msra.mxu0 0.0
    %395 = vmatprep.mubr.f32.mxu0 0.0
    %v396 = vand.u32 %v80, 4294901760
    %v397 = vsub.f32 %v80, %v396
    %v398 = vand.u32 %v397, 4294901760
    %399 = vmatmul.mubr.f32.gmra.mrb[0].mxu0 %v398
    %v400 = vpop.f32.mrb[0].mxu0
    %v401 = vadd.f32 %v325, %v400
    %v402 = vpop.f32.mrb[0].mxu0
    %403 = vdwg.mxu0
    %404 = vmatprep.subr.mxu0 0.0
    %v405 = vand.u32 %v65, 4294901760
    %v406 = vsub.f32 %v65, %v405
    %v407 = vand.u32 %v406, 4294901760
    %408 = vmatpush1.msra.mxu0 %v407
    %409 = vmatprep.subr.mxu0 0.0
    %v410 = vand.u32 %v66, 4294901760
    %v411 = vsub.f32 %v66, %v410
    %v412 = vand.u32 %v411, 4294901760
    %413 = vmatpush1.msra.mxu0 %v412
    %414 = vmatprep.subr.mxu0 0.0
    %v415 = vand.u32 %v84, 4294901760
    %v416 = vsub.f32 %v84, %v415
    %v417 = vand.u32 %v416, 4294901760
    %418 = vmatpush1.msra.mxu0 %v417
    %419 = vmatprep.subr.mxu0 0.0
    %420 = vmatpush1.msra.mxu0 0.0
    %421 = vmatprep.subr.mxu0 0.0
    %422 = vmatpush1.msra.mxu0 0.0
    %423 = vmatprep.subr.mxu0 0.0
    %424 = vmatpush1.msra.mxu0 0.0
    %425 = vmatprep.subr.mxu0 0.0
    %426 = vmatpush1.msra.mxu0 0.0
    %427 = vmatprep.subr.mxu0 0.0
    %428 = vmatpush1.msra.mxu0 0.0
    %429 = vmatprep.subr.mxu0 0.0
    %430 = vmatpush1.msra.mxu0 0.0
    %431 = vmatprep.subr.mxu0 0.0
    %432 = vmatpush1.msra.mxu0 0.0
    %433 = vmatprep.subr.mxu0 0.0
    %434 = vmatpush1.msra.mxu0 0.0
    %435 = vmatprep.subr.mxu0 0.0
    %436 = vmatpush1.msra.mxu0 0.0
    %437 = vmatprep.subr.mxu0 0.0
    %438 = vmatpush1.msra.mxu0 0.0
    %439 = vmatprep.subr.mxu0 0.0
    %440 = vmatpush1.msra.mxu0 0.0
    %441 = vmatprep.subr.mxu0 0.0
    %442 = vmatpush1.msra.mxu0 0.0
    %443 = vmatprep.subr.mxu0 0.0
    %444 = vmatpush1.msra.mxu0 0.0
    %445 = vmatprep.subr.mxu0 0.0
    %446 = vmatpush1.msra.mxu0 0.0
    %447 = vmatprep.subr.mxu0 0.0
    %448 = vmatpush1.msra.mxu0 0.0
    %449 = vmatprep.subr.mxu0 0.0
    %450 = vmatpush1.msra.mxu0 0.0
    %451 = vmatprep.subr.mxu0 0.0
    %452 = vmatpush1.msra.mxu0 0.0
    %453 = vmatprep.subr.mxu0 0.0
    %454 = vmatpush1.msra.mxu0 0.0
    %455 = vmatprep.subr.mxu0 0.0
    %456 = vmatpush1.msra.mxu0 0.0
    %457 = vmatprep.subr.mxu0 0.0
    %458 = vmatpush1.msra.mxu0 0.0
    %459 = vmatprep.subr.mxu0 0.0
    %460 = vmatpush1.msra.mxu0 0.0
    %461 = vmatprep.subr.mxu0 0.0
    %462 = vmatpush1.msra.mxu0 0.0
    %463 = vmatprep.subr.mxu0 0.0
    %464 = vmatpush1.msra.mxu0 0.0
    %465 = vmatprep.subr.mxu0 0.0
    %466 = vmatpush1.msra.mxu0 0.0
    %467 = vmatprep.subr.mxu0 0.0
    %468 = vmatpush1.msra.mxu0 0.0
    %469 = vmatprep.subr.mxu0 0.0
    %470 = vmatpush1.msra.mxu0 0.0
    %471 = vmatprep.subr.mxu0 0.0
    %472 = vmatpush1.msra.mxu0 0.0
    %473 = vmatprep.subr.mxu0 0.0
    %474 = vmatpush1.msra.mxu0 0.0
    %475 = vmatprep.subr.mxu0 0.0
    %476 = vmatpush1.msra.mxu0 0.0
    %477 = vmatprep.mubr.f32.mxu0 0.0
    %v478 = vand.u32 %v80, 4294901760
    %479 = vmatmul.mubr.f32.gmra.mrb[0].mxu0 %v478
    %v480 = vpop.f32.mrb[0].mxu0
    %v481 = vadd.f32 %v401, %v480
    %v482 = vpop.f32.mrb[0].mxu0
    %483 = vdwg.mxu0
    %484 = vmatprep.subr.mxu0 0.0
    %v485 = vand.u32 %v65, 4294901760
    %486 = vmatpush1.msra.mxu0 %v485
    %487 = vmatprep.subr.mxu0 0.0
    %v488 = vand.u32 %v66, 4294901760
    %489 = vmatpush1.msra.mxu0 %v488
    %490 = vmatprep.subr.mxu0 0.0
    %v491 = vand.u32 %v84, 4294901760
    %492 = vmatpush1.msra.mxu0 %v491
    %493 = vmatprep.subr.mxu0 0.0
    %494 = vmatpush1.msra.mxu0 0.0
    %495 = vmatprep.subr.mxu0 0.0
    %496 = vmatpush1.msra.mxu0 0.0
    %497 = vmatprep.subr.mxu0 0.0
    %498 = vmatpush1.msra.mxu0 0.0
    %499 = vmatprep.subr.mxu0 0.0
    %500 = vmatpush1.msra.mxu0 0.0
    %501 = vmatprep.subr.mxu0 0.0
    %502 = vmatpush1.msra.mxu0 0.0
    %503 = vmatprep.subr.mxu0 0.0
    %504 = vmatpush1.msra.mxu0 0.0
    %505 = vmatprep.subr.mxu0 0.0
    %506 = vmatpush1.msra.mxu0 0.0
    %507 = vmatprep.subr.mxu0 0.0
    %508 = vmatpush1.msra.mxu0 0.0
    %509 = vmatprep.subr.mxu0 0.0
    %510 = vmatpush1.msra.mxu0 0.0
    %511 = vmatprep.subr.mxu0 0.0
    %512 = vmatpush1.msra.mxu0 0.0
    %513 = vmatprep.subr.mxu0 0.0
    %514 = vmatpush1.msra.mxu0 0.0
    %515 = vmatprep.subr.mxu0 0.0
    %516 = vmatpush1.msra.mxu0 0.0
    %517 = vmatprep.subr.mxu0 0.0
    %518 = vmatpush1.msra.mxu0 0.0
    %519 = vmatprep.subr.mxu0 0.0
    %520 = vmatpush1.msra.mxu0 0.0
    %521 = vmatprep.subr.mxu0 0.0
    %522 = vmatpush1.msra.mxu0 0.0
    %523 = vmatprep.subr.mxu0 0.0
    %524 = vmatpush1.msra.mxu0 0.0
    %525 = vmatprep.subr.mxu0 0.0
    %526 = vmatpush1.msra.mxu0 0.0
    %527 = vmatprep.subr.mxu0 0.0
    %528 = vmatpush1.msra.mxu0 0.0
    %529 = vmatprep.subr.mxu0 0.0
    %530 = vmatpush1.msra.mxu0 0.0
    %531 = vmatprep.subr.mxu0 0.0
    %532 = vmatpush1.msra.mxu0 0.0
    %533 = vmatprep.subr.mxu0 0.0
    %534 = vmatpush1.msra.mxu0 0.0
    %535 = vmatprep.subr.mxu0 0.0
    %536 = vmatpush1.msra.mxu0 0.0
    %537 = vmatprep.subr.mxu0 0.0
    %538 = vmatpush1.msra.mxu0 0.0
    %539 = vmatprep.subr.mxu0 0.0
    %540 = vmatpush1.msra.mxu0 0.0
    %541 = vmatprep.subr.mxu0 0.0
    %542 = vmatpush1.msra.mxu0 0.0
    %543 = vmatprep.subr.mxu0 0.0
    %544 = vmatpush1.msra.mxu0 0.0
    %545 = vmatprep.subr.mxu0 0.0
    %546 = vmatpush1.msra.mxu0 0.0
    %547 = vmatprep.subr.mxu0 0.0
    %548 = vmatpush1.msra.mxu0 0.0
    %549 = vmatprep.subr.mxu0 0.0
    %550 = vmatpush1.msra.mxu0 0.0
    %551 = vmatprep.mubr.f32.mxu0 0.0
    %v552 = vand.u32 %v80, 4294901760
    %553 = vmatmul.mubr.f32.gmra.mrb[0].mxu0 %v552
    %v554 = vpop.f32.mrb[0].mxu0
    %v555 = vadd.f32 %v481, %v554
    %v556 = vpop.f32.mrb[0].mxu0
    %557 = vdwg.mxu0
    %v559 = vsel %vm78, %v555, 0
    %v562 = vsel %vm82, %v70, 0
    %564 = vmatprep.subr.mxu0 0.0
    %v565 = vand.u32 %v68, 4294901760
    %566 = vmatpush1.msra.mxu0 %v565
    %567 = vmatprep.subr.mxu0 0.0
    %v568 = vand.u32 %v69, 4294901760
    %569 = vmatpush1.msra.mxu0 %v568
    %570 = vmatprep.subr.mxu0 0.0
    %v571 = vand.u32 %v562, 4294901760
    %572 = vmatpush1.msra.mxu0 %v571
    %573 = vmatprep.subr.mxu0 0.0
    %574 = vmatpush1.msra.mxu0 0.0
    %575 = vmatprep.subr.mxu0 0.0
    %576 = vmatpush1.msra.mxu0 0.0
    %577 = vmatprep.subr.mxu0 0.0
    %578 = vmatpush1.msra.mxu0 0.0
    %579 = vmatprep.subr.mxu0 0.0
    %580 = vmatpush1.msra.mxu0 0.0
    %581 = vmatprep.subr.mxu0 0.0
    %582 = vmatpush1.msra.mxu0 0.0
    %583 = vmatprep.subr.mxu0 0.0
    %584 = vmatpush1.msra.mxu0 0.0
    %585 = vmatprep.subr.mxu0 0.0
    %586 = vmatpush1.msra.mxu0 0.0
    %587 = vmatprep.subr.mxu0 0.0
    %588 = vmatpush1.msra.mxu0 0.0
    %589 = vmatprep.subr.mxu0 0.0
    %590 = vmatpush1.msra.mxu0 0.0
    %591 = vmatprep.subr.mxu0 0.0
    %592 = vmatpush1.msra.mxu0 0.0
    %593 = vmatprep.subr.mxu0 0.0
    %594 = vmatpush1.msra.mxu0 0.0
    %595 = vmatprep.subr.mxu0 0.0
    %596 = vmatpush1.msra.mxu0 0.0
    %597 = vmatprep.subr.mxu0 0.0
    %598 = vmatpush1.msra.mxu0 0.0
    %599 = vmatprep.subr.mxu0 0.0
    %600 = vmatpush1.msra.mxu0 0.0
    %601 = vmatprep.subr.mxu0 0.0
    %602 = vmatpush1.msra.mxu0 0.0
    %603 = vmatprep.subr.mxu0 0.0
    %604 = vmatpush1.msra.mxu0 0.0
    %605 = vmatprep.subr.mxu0 0.0
    %606 = vmatpush1.msra.mxu0 0.0
    %607 = vmatprep.subr.mxu0 0.0
    %608 = vmatpush1.msra.mxu0 0.0
    %609 = vmatprep.subr.mxu0 0.0
    %610 = vmatpush1.msra.mxu0 0.0
    %611 = vmatprep.subr.mxu0 0.0
    %612 = vmatpush1.msra.mxu0 0.0
    %613 = vmatprep.subr.mxu0 0.0
    %614 = vmatpush1.msra.mxu0 0.0
    %615 = vmatprep.subr.mxu0 0.0
    %616 = vmatpush1.msra.mxu0 0.0
    %617 = vmatprep.subr.mxu0 0.0
    %618 = vmatpush1.msra.mxu0 0.0
    %619 = vmatprep.subr.mxu0 0.0
    %620 = vmatpush1.msra.mxu0 0.0
    %621 = vmatprep.subr.mxu0 0.0
    %622 = vmatpush1.msra.mxu0 0.0
    %623 = vmatprep.subr.mxu0 0.0
    %624 = vmatpush1.msra.mxu0 0.0
    %625 = vmatprep.subr.mxu0 0.0
    %626 = vmatpush1.msra.mxu0 0.0
    %627 = vmatprep.subr.mxu0 0.0
    %628 = vmatpush1.msra.mxu0 0.0
    %629 = vmatprep.subr.mxu0 0.0
    %630 = vmatpush1.msra.mxu0 0.0
    %631 = vmatprep.mubr.f32.mxu0 0.0
    %v632 = vand.u32 %v559, 4294901760
    %v633 = vsub.f32 %v559, %v632
    %v634 = vand.u32 %v633, 4294901760
    %v635 = vsub.f32 %v633, %v634
    %v636 = vand.u32 %v635, 4294901760
    %637 = vmatmul.mubr.f32.gmra.mrb[0].mxu0 %v636
    %v638 = vpop.f32.mrb[0].mxu0
    %v639 = vadd.f32 1.0, %v638
    %v640 = vpop.f32.mrb[0].mxu0
    %641 = vdwg.mxu0
    %642 = vmatprep.subr.mxu0 0.0
    %v643 = vand.u32 %v68, 4294901760
    %v644 = vsub.f32 %v68, %v643
    %v645 = vand.u32 %v644, 4294901760
    %v646 = vsub.f32 %v644, %v645
    %v647 = vand.u32 %v646, 4294901760
    %648 = vmatpush1.msra.mxu0 %v647
    %649 = vmatprep.subr.mxu0 0.0
    %v650 = vand.u32 %v69, 4294901760
    %v651 = vsub.f32 %v69, %v650
    %v652 = vand.u32 %v651, 4294901760
    %v653 = vsub.f32 %v651, %v652
    %v654 = vand.u32 %v653, 4294901760
    %655 = vmatpush1.msra.mxu0 %v654
    %656 = vmatprep.subr.mxu0 0.0
    %v657 = vand.u32 %v562, 4294901760
    %v658 = vsub.f32 %v562, %v657
    %v659 = vand.u32 %v658, 4294901760
    %v660 = vsub.f32 %v658, %v659
    %v661 = vand.u32 %v660, 4294901760
    %662 = vmatpush1.msra.mxu0 %v661
    %663 = vmatprep.subr.mxu0 0.0
    %664 = vmatpush1.msra.mxu0 0.0
    %665 = vmatprep.subr.mxu0 0.0
    %666 = vmatpush1.msra.mxu0 0.0
    %667 = vmatprep.subr.mxu0 0.0
    %668 = vmatpush1.msra.mxu0 0.0
    %669 = vmatprep.subr.mxu0 0.0
    %670 = vmatpush1.msra.mxu0 0.0
    %671 = vmatprep.subr.mxu0 0.0
    %672 = vmatpush1.msra.mxu0 0.0
    %673 = vmatprep.subr.mxu0 0.0
    %674 = vmatpush1.msra.mxu0 0.0
    %675 = vmatprep.subr.mxu0 0.0
    %676 = vmatpush1.msra.mxu0 0.0
    %677 = vmatprep.subr.mxu0 0.0
    %678 = vmatpush1.msra.mxu0 0.0
    %679 = vmatprep.subr.mxu0 0.0
    %680 = vmatpush1.msra.mxu0 0.0
    %681 = vmatprep.subr.mxu0 0.0
    %682 = vmatpush1.msra.mxu0 0.0
    %683 = vmatprep.subr.mxu0 0.0
    %684 = vmatpush1.msra.mxu0 0.0
    %685 = vmatprep.subr.mxu0 0.0
    %686 = vmatpush1.msra.mxu0 0.0
    %687 = vmatprep.subr.mxu0 0.0
    %688 = vmatpush1.msra.mxu0 0.0
    %689 = vmatprep.subr.mxu0 0.0
    %690 = vmatpush1.msra.mxu0 0.0
    %691 = vmatprep.subr.mxu0 0.0
    %692 = vmatpush1.msra.mxu0 0.0
    %693 = vmatprep.subr.mxu0 0.0
    %694 = vmatpush1.msra.mxu0 0.0
    %695 = vmatprep.subr.mxu0 0.0
    %696 = vmatpush1.msra.mxu0 0.0
    %697 = vmatprep.subr.mxu0 0.0
    %698 = vmatpush1.msra.mxu0 0.0
    %699 = vmatprep.subr.mxu0 0.0
    %700 = vmatpush1.msra.mxu0 0.0
    %701 = vmatprep.subr.mxu0 0.0
    %702 = vmatpush1.msra.mxu0 0.0
    %703 = vmatprep.subr.mxu0 0.0
    %704 = vmatpush1.msra.mxu0 0.0
    %705 = vmatprep.subr.mxu0 0.0
    %706 = vmatpush1.msra.mxu0 0.0
    %707 = vmatprep.subr.mxu0 0.0
    %708 = vmatpush1.msra.mxu0 0.0
    %709 = vmatprep.subr.mxu0 0.0
    %710 = vmatpush1.msra.mxu0 0.0
    %711 = vmatprep.subr.mxu0 0.0
    %712 = vmatpush1.msra.mxu0 0.0
    %713 = vmatprep.subr.mxu0 0.0
    %714 = vmatpush1.msra.mxu0 0.0
    %715 = vmatprep.subr.mxu0 0.0
    %716 = vmatpush1.msra.mxu0 0.0
    %717 = vmatprep.subr.mxu0 0.0
    %718 = vmatpush1.msra.mxu0 0.0
    %719 = vmatprep.subr.mxu0 0.0
    %720 = vmatpush1.msra.mxu0 0.0
    %721 = vmatprep.mubr.f32.mxu0 0.0
    %v722 = vand.u32 %v559, 4294901760
    %723 = vmatmul.mubr.f32.gmra.mrb[0].mxu0 %v722
    %v724 = vpop.f32.mrb[0].mxu0
    %v725 = vadd.f32 %v639, %v724
    %v726 = vpop.f32.mrb[0].mxu0
    %727 = vdwg.mxu0
    %728 = vmatprep.subr.mxu0 0.0
    %v729 = vand.u32 %v68, 4294901760
    %v730 = vsub.f32 %v68, %v729
    %731 = vmatpush1.msra.mxu0 %v730
    %732 = vmatprep.subr.mxu0 0.0
    %v733 = vand.u32 %v69, 4294901760
    %v734 = vsub.f32 %v69, %v733
    %735 = vmatpush1.msra.mxu0 %v734
    %736 = vmatprep.subr.mxu0 0.0
    %v737 = vand.u32 %v562, 4294901760
    %v738 = vsub.f32 %v562, %v737
    %739 = vmatpush1.msra.mxu0 %v738
    %740 = vmatprep.subr.mxu0 0.0
    %741 = vmatpush1.msra.mxu0 0.0
    %742 = vmatprep.subr.mxu0 0.0
    %743 = vmatpush1.msra.mxu0 0.0
    %744 = vmatprep.subr.mxu0 0.0
    %745 = vmatpush1.msra.mxu0 0.0
    %746 = vmatprep.subr.mxu0 0.0
    %747 = vmatpush1.msra.mxu0 0.0
    %748 = vmatprep.subr.mxu0 0.0
    %749 = vmatpush1.msra.mxu0 0.0
    %750 = vmatprep.subr.mxu0 0.0
    %751 = vmatpush1.msra.mxu0 0.0
    %752 = vmatprep.subr.mxu0 0.0
    %753 = vmatpush1.msra.mxu0 0.0
    %754 = vmatprep.subr.mxu0 0.0
    %755 = vmatpush1.msra.mxu0 0.0
    %756 = vmatprep.subr.mxu0 0.0
    %757 = vmatpush1.msra.mxu0 0.0
    %758 = vmatprep.subr.mxu0 0.0
    %759 = vmatpush1.msra.mxu0 0.0
    %760 = vmatprep.subr.mxu0 0.0
    %761 = vmatpush1.msra.mxu0 0.0
    %762 = vmatprep.subr.mxu0 0.0
    %763 = vmatpush1.msra.mxu0 0.0
    %764 = vmatprep.subr.mxu0 0.0
    %765 = vmatpush1.msra.mxu0 0.0
    %766 = vmatprep.subr.mxu0 0.0
    %767 = vmatpush1.msra.mxu0 0.0
    %768 = vmatprep.subr.mxu0 0.0
    %769 = vmatpush1.msra.mxu0 0.0
    %770 = vmatprep.subr.mxu0 0.0
    %771 = vmatpush1.msra.mxu0 0.0
    %772 = vmatprep.subr.mxu0 0.0
    %773 = vmatpush1.msra.mxu0 0.0
    %774 = vmatprep.subr.mxu0 0.0
    %775 = vmatpush1.msra.mxu0 0.0
    %776 = vmatprep.subr.mxu0 0.0
    %777 = vmatpush1.msra.mxu0 0.0
    %778 = vmatprep.subr.mxu0 0.0
    %779 = vmatpush1.msra.mxu0 0.0
    %780 = vmatprep.subr.mxu0 0.0
    %781 = vmatpush1.msra.mxu0 0.0
    %782 = vmatprep.subr.mxu0 0.0
    %783 = vmatpush1.msra.mxu0 0.0
    %784 = vmatprep.subr.mxu0 0.0
    %785 = vmatpush1.msra.mxu0 0.0
    %786 = vmatprep.subr.mxu0 0.0
    %787 = vmatpush1.msra.mxu0 0.0
    %788 = vmatprep.subr.mxu0 0.0
    %789 = vmatpush1.msra.mxu0 0.0
    %790 = vmatprep.subr.mxu0 0.0
    %791 = vmatpush1.msra.mxu0 0.0
    %792 = vmatprep.subr.mxu0 0.0
    %793 = vmatpush1.msra.mxu0 0.0
    %794 = vmatprep.subr.mxu0 0.0
    %795 = vmatpush1.msra.mxu0 0.0
    %796 = vmatprep.subr.mxu0 0.0
    %797 = vmatpush1.msra.mxu0 0.0
    %798 = vmatprep.mubr.f32.mxu0 0.0
    %v799 = vand.u32 %v559, 4294901760
    %v800 = vsub.f32 %v559, %v799
    %801 = vmatmul.mubr.f32.gmra.mrb[0].mxu0 %v800
    %v802 = vpop.f32.mrb[0].mxu0
    %v803 = vadd.f32 %v725, %v802
    %v804 = vpop.f32.mrb[0].mxu0
    %805 = vdwg.mxu0
    %806 = vmatprep.subr.mxu0 0.0
    %v807 = vand.u32 %v68, 4294901760
    %808 = vmatpush1.msra.mxu0 %v807
    %809 = vmatprep.subr.mxu0 0.0
    %v810 = vand.u32 %v69, 4294901760
    %811 = vmatpush1.msra.mxu0 %v810
    %812 = vmatprep.subr.mxu0 0.0
    %v813 = vand.u32 %v562, 4294901760
    %814 = vmatpush1.msra.mxu0 %v813
    %815 = vmatprep.subr.mxu0 0.0
    %816 = vmatpush1.msra.mxu0 0.0
    %817 = vmatprep.subr.mxu0 0.0
    %818 = vmatpush1.msra.mxu0 0.0
    %819 = vmatprep.subr.mxu0 0.0
    %820 = vmatpush1.msra.mxu0 0.0
    %821 = vmatprep.subr.mxu0 0.0
    %822 = vmatpush1.msra.mxu0 0.0
    %823 = vmatprep.subr.mxu0 0.0
    %824 = vmatpush1.msra.mxu0 0.0
    %825 = vmatprep.subr.mxu0 0.0
    %826 = vmatpush1.msra.mxu0 0.0
    %827 = vmatprep.subr.mxu0 0.0
    %828 = vmatpush1.msra.mxu0 0.0
    %829 = vmatprep.subr.mxu0 0.0
    %830 = vmatpush1.msra.mxu0 0.0
    %831 = vmatprep.subr.mxu0 0.0
    %832 = vmatpush1.msra.mxu0 0.0
    %833 = vmatprep.subr.mxu0 0.0
    %834 = vmatpush1.msra.mxu0 0.0
    %835 = vmatprep.subr.mxu0 0.0
    %836 = vmatpush1.msra.mxu0 0.0
    %837 = vmatprep.subr.mxu0 0.0
    %838 = vmatpush1.msra.mxu0 0.0
    %839 = vmatprep.subr.mxu0 0.0
    %840 = vmatpush1.msra.mxu0 0.0
    %841 = vmatprep.subr.mxu0 0.0
    %842 = vmatpush1.msra.mxu0 0.0
    %843 = vmatprep.subr.mxu0 0.0
    %844 = vmatpush1.msra.mxu0 0.0
    %845 = vmatprep.subr.mxu0 0.0
    %846 = vmatpush1.msra.mxu0 0.0
    %847 = vmatprep.subr.mxu0 0.0
    %848 = vmatpush1.msra.mxu0 0.0
    %849 = vmatprep.subr.mxu0 0.0
    %850 = vmatpush1.msra.mxu0 0.0
    %851 = vmatprep.subr.mxu0 0.0
    %852 = vmatpush1.msra.mxu0 0.0
    %853 = vmatprep.subr.mxu0 0.0
    %854 = vmatpush1.msra.mxu0 0.0
    %855 = vmatprep.subr.mxu0 0.0
    %856 = vmatpush1.msra.mxu0 0.0
    %857 = vmatprep.subr.mxu0 0.0
    %858 = vmatpush1.msra.mxu0 0.0
    %859 = vmatprep.subr.mxu0 0.0
    %860 = vmatpush1.msra.mxu0 0.0
    %861 = vmatprep.subr.mxu0 0.0
    %862 = vmatpush1.msra.mxu0 0.0
    %863 = vmatprep.subr.mxu0 0.0
    %864 = vmatpush1.msra.mxu0 0.0
    %865 = vmatprep.subr.mxu0 0.0
    %866 = vmatpush1.msra.mxu0 0.0
    %867 = vmatprep.subr.mxu0 0.0
    %868 = vmatpush1.msra.mxu0 0.0
    %869 = vmatprep.subr.mxu0 0.0
    %870 = vmatpush1.msra.mxu0 0.0
    %871 = vmatprep.subr.mxu0 0.0
    %872 = vmatpush1.msra.mxu0 0.0
    %873 = vmatprep.mubr.f32.mxu0 0.0
    %v874 = vand.u32 %v559, 4294901760
    %v875 = vsub.f32 %v559, %v874
    %v876 = vand.u32 %v875, 4294901760
    %877 = vmatmul.mubr.f32.gmra.mrb[0].mxu0 %v876
    %v878 = vpop.f32.mrb[0].mxu0
    %v879 = vadd.f32 %v803, %v878
    %v880 = vpop.f32.mrb[0].mxu0
    %881 = vdwg.mxu0
    %882 = vmatprep.subr.mxu0 0.0
    %v883 = vand.u32 %v68, 4294901760
    %v884 = vsub.f32 %v68, %v883
    %v885 = vand.u32 %v884, 4294901760
    %886 = vmatpush1.msra.mxu0 %v885
    %887 = vmatprep.subr.mxu0 0.0
    %v888 = vand.u32 %v69, 4294901760
    %v889 = vsub.f32 %v69, %v888
    %v890 = vand.u32 %v889, 4294901760
    %891 = vmatpush1.msra.mxu0 %v890
    %892 = vmatprep.subr.mxu0 0.0
    %v893 = vand.u32 %v562, 4294901760
    %v894 = vsub.f32 %v562, %v893
    %v895 = vand.u32 %v894, 4294901760
    %896 = vmatpush1.msra.mxu0 %v895
    %897 = vmatprep.subr.mxu0 0.0
    %898 = vmatpush1.msra.mxu0 0.0
    %899 = vmatprep.subr.mxu0 0.0
    %900 = vmatpush1.msra.mxu0 0.0
    %901 = vmatprep.subr.mxu0 0.0
    %902 = vmatpush1.msra.mxu0 0.0
    %903 = vmatprep.subr.mxu0 0.0
    %904 = vmatpush1.msra.mxu0 0.0
    %905 = vmatprep.subr.mxu0 0.0
    %906 = vmatpush1.msra.mxu0 0.0
    %907 = vmatprep.subr.mxu0 0.0
    %908 = vmatpush1.msra.mxu0 0.0
    %909 = vmatprep.subr.mxu0 0.0
    %910 = vmatpush1.msra.mxu0 0.0
    %911 = vmatprep.subr.mxu0 0.0
    %912 = vmatpush1.msra.mxu0 0.0
    %913 = vmatprep.subr.mxu0 0.0
    %914 = vmatpush1.msra.mxu0 0.0
    %915 = vmatprep.subr.mxu0 0.0
    %916 = vmatpush1.msra.mxu0 0.0
    %917 = vmatprep.subr.mxu0 0.0
    %918 = vmatpush1.msra.mxu0 0.0
    %919 = vmatprep.subr.mxu0 0.0
    %920 = vmatpush1.msra.mxu0 0.0
    %921 = vmatprep.subr.mxu0 0.0
    %922 = vmatpush1.msra.mxu0 0.0
    %923 = vmatprep.subr.mxu0 0.0
    %924 = vmatpush1.msra.mxu0 0.0
    %925 = vmatprep.subr.mxu0 0.0
    %926 = vmatpush1.msra.mxu0 0.0
    %927 = vmatprep.subr.mxu0 0.0
    %928 = vmatpush1.msra.mxu0 0.0
    %929 = vmatprep.subr.mxu0 0.0
    %930 = vmatpush1.msra.mxu0 0.0
    %931 = vmatprep.subr.mxu0 0.0
    %932 = vmatpush1.msra.mxu0 0.0
    %933 = vmatprep.subr.mxu0 0.0
    %934 = vmatpush1.msra.mxu0 0.0
    %935 = vmatprep.subr.mxu0 0.0
    %936 = vmatpush1.msra.mxu0 0.0
    %937 = vmatprep.subr.mxu0 0.0
    %938 = vmatpush1.msra.mxu0 0.0
    %939 = vmatprep.subr.mxu0 0.0
    %940 = vmatpush1.msra.mxu0 0.0
    %941 = vmatprep.subr.mxu0 0.0
    %942 = vmatpush1.msra.mxu0 0.0
    %943 = vmatprep.subr.mxu0 0.0
    %944 = vmatpush1.msra.mxu0 0.0
    %945 = vmatprep.subr.mxu0 0.0
    %946 = vmatpush1.msra.mxu0 0.0
    %947 = vmatprep.subr.mxu0 0.0
    %948 = vmatpush1.msra.mxu0 0.0
    %949 = vmatprep.subr.mxu0 0.0
    %950 = vmatpush1.msra.mxu0 0.0
    %951 = vmatprep.subr.mxu0 0.0
    %952 = vmatpush1.msra.mxu0 0.0
    %953 = vmatprep.subr.mxu0 0.0
    %954 = vmatpush1.msra.mxu0 0.0
    %955 = vmatprep.mubr.f32.mxu0 0.0
    %v956 = vand.u32 %v559, 4294901760
    %957 = vmatmul.mubr.f32.gmra.mrb[0].mxu0 %v956
    %v958 = vpop.f32.mrb[0].mxu0
    %v959 = vadd.f32 %v879, %v958
    %v960 = vpop.f32.mrb[0].mxu0
    %961 = vdwg.mxu0
    %962 = vmatprep.subr.mxu0 0.0
    %v963 = vand.u32 %v68, 4294901760
    %964 = vmatpush1.msra.mxu0 %v963
    %965 = vmatprep.subr.mxu0 0.0
    %v966 = vand.u32 %v69, 4294901760
    %967 = vmatpush1.msra.mxu0 %v966
    %968 = vmatprep.subr.mxu0 0.0
    %v969 = vand.u32 %v562, 4294901760
    %970 = vmatpush1.msra.mxu0 %v969
    %971 = vmatprep.subr.mxu0 0.0
    %972 = vmatpush1.msra.mxu0 0.0
    %973 = vmatprep.subr.mxu0 0.0
    %974 = vmatpush1.msra.mxu0 0.0
    %975 = vmatprep.subr.mxu0 0.0
    %976 = vmatpush1.msra.mxu0 0.0
    %977 = vmatprep.subr.mxu0 0.0
    %978 = vmatpush1.msra.mxu0 0.0
    %979 = vmatprep.subr.mxu0 0.0
    %980 = vmatpush1.msra.mxu0 0.0
    %981 = vmatprep.subr.mxu0 0.0
    %982 = vmatpush1.msra.mxu0 0.0
    %983 = vmatprep.subr.mxu0 0.0
    %984 = vmatpush1.msra.mxu0 0.0
    %985 = vmatprep.subr.mxu0 0.0
    %986 = vmatpush1.msra.mxu0 0.0
    %987 = vmatprep.subr.mxu0 0.0
    %988 = vmatpush1.msra.mxu0 0.0
    %989 = vmatprep.subr.mxu0 0.0
    %990 = vmatpush1.msra.mxu0 0.0
    %991 = vmatprep.subr.mxu0 0.0
    %992 = vmatpush1.msra.mxu0 0.0
    %993 = vmatprep.subr.mxu0 0.0
    %994 = vmatpush1.msra.mxu0 0.0
    %995 = vmatprep.subr.mxu0 0.0
    %996 = vmatpush1.msra.mxu0 0.0
    %997 = vmatprep.subr.mxu0 0.0
    %998 = vmatpush1.msra.mxu0 0.0
    %999 = vmatprep.subr.mxu0 0.0
    %1000 = vmatpush1.msra.mxu0 0.0
    %1001 = vmatprep.subr.mxu0 0.0
    %1002 = vmatpush1.msra.mxu0 0.0
    %1003 = vmatprep.subr.mxu0 0.0
    %1004 = vmatpush1.msra.mxu0 0.0
    %1005 = vmatprep.subr.mxu0 0.0
    %1006 = vmatpush1.msra.mxu0 0.0
    %1007 = vmatprep.subr.mxu0 0.0
    %1008 = vmatpush1.msra.mxu0 0.0
    %1009 = vmatprep.subr.mxu0 0.0
    %1010 = vmatpush1.msra.mxu0 0.0
    %1011 = vmatprep.subr.mxu0 0.0
    %1012 = vmatpush1.msra.mxu0 0.0
    %1013 = vmatprep.subr.mxu0 0.0
    %1014 = vmatpush1.msra.mxu0 0.0
    %1015 = vmatprep.subr.mxu0 0.0
    %1016 = vmatpush1.msra.mxu0 0.0
    %1017 = vmatprep.subr.mxu0 0.0
    %1018 = vmatpush1.msra.mxu0 0.0
    %1019 = vmatprep.subr.mxu0 0.0
    %1020 = vmatpush1.msra.mxu0 0.0
    %1021 = vmatprep.subr.mxu0 0.0
    %1022 = vmatpush1.msra.mxu0 0.0
    %1023 = vmatprep.subr.mxu0 0.0
    %1024 = vmatpush1.msra.mxu0 0.0
    %1025 = vmatprep.subr.mxu0 0.0
    %1026 = vmatpush1.msra.mxu0 0.0
    %1027 = vmatprep.subr.mxu0 0.0
    %1028 = vmatpush1.msra.mxu0 0.0
    %1029 = vmatprep.mubr.f32.mxu0 0.0
    %v1030 = vand.u32 %v559, 4294901760
    %1031 = vmatmul.mubr.f32.gmra.mrb[0].mxu0 %v1030
    %v1032 = vpop.f32.mrb[0].mxu0
    %v1033 = vadd.f32 %v959, %v1032
    %v1034 = vpop.f32.mrb[0].mxu0
    %1035 = vdwg.mxu0
    %v1036 = vmax.f32 %v1033, 0.0
    %v1038 = vsel %vm78, %v1036, 0
    %1040 = vmatprep.subr.mxu0 0.0
    %v1041 = vand.u32 %v65, 4294901760
    %1042 = vmatpush1.msra.mxu0 %v1041
    %1043 = vmatprep.subr.mxu0 0.0
    %v1044 = vand.u32 %v66, 4294901760
    %1045 = vmatpush1.msra.mxu0 %v1044
    %1046 = vmatprep.subr.mxu0 0.0
    %v1047 = vand.u32 %v84, 4294901760
    %1048 = vmatpush1.msra.mxu0 %v1047
    %1049 = vmatprep.subr.mxu0 0.0
    %1050 = vmatpush1.msra.mxu0 0.0
    %1051 = vmatprep.subr.mxu0 0.0
    %1052 = vmatpush1.msra.mxu0 0.0
    %1053 = vmatprep.subr.mxu0 0.0
    %1054 = vmatpush1.msra.mxu0 0.0
    %1055 = vmatprep.subr.mxu0 0.0
    %1056 = vmatpush1.msra.mxu0 0.0
    %1057 = vmatprep.subr.mxu0 0.0
    %1058 = vmatpush1.msra.mxu0 0.0
    %1059 = vmatprep.subr.mxu0 0.0
    %1060 = vmatpush1.msra.mxu0 0.0
    %1061 = vmatprep.subr.mxu0 0.0
    %1062 = vmatpush1.msra.mxu0 0.0
    %1063 = vmatprep.subr.mxu0 0.0
    %1064 = vmatpush1.msra.mxu0 0.0
    %1065 = vmatprep.subr.mxu0 0.0
    %1066 = vmatpush1.msra.mxu0 0.0
    %1067 = vmatprep.subr.mxu0 0.0
    %1068 = vmatpush1.msra.mxu0 0.0
    %1069 = vmatprep.subr.mxu0 0.0
    %1070 = vmatpush1.msra.mxu0 0.0
    %1071 = vmatprep.subr.mxu0 0.0
    %1072 = vmatpush1.msra.mxu0 0.0
    %1073 = vmatprep.subr.mxu0 0.0
    %1074 = vmatpush1.msra.mxu0 0.0
    %1075 = vmatprep.subr.mxu0 0.0
    %1076 = vmatpush1.msra.mxu0 0.0
    %1077 = vmatprep.subr.mxu0 0.0
    %1078 = vmatpush1.msra.mxu0 0.0
    %1079 = vmatprep.subr.mxu0 0.0
    %1080 = vmatpush1.msra.mxu0 0.0
    %1081 = vmatprep.subr.mxu0 0.0
    %1082 = vmatpush1.msra.mxu0 0.0
    %1083 = vmatprep.subr.mxu0 0.0
    %1084 = vmatpush1.msra.mxu0 0.0
    %1085 = vmatprep.subr.mxu0 0.0
    %1086 = vmatpush1.msra.mxu0 0.0
    %1087 = vmatprep.subr.mxu0 0.0
    %1088 = vmatpush1.msra.mxu0 0.0
    %1089 = vmatprep.subr.mxu0 0.0
    %1090 = vmatpush1.msra.mxu0 0.0
    %1091 = vmatprep.subr.mxu0 0.0
    %1092 = vmatpush1.msra.mxu0 0.0
    %1093 = vmatprep.subr.mxu0 0.0
    %1094 = vmatpush1.msra.mxu0 0.0
    %1095 = vmatprep.subr.mxu0 0.0
    %1096 = vmatpush1.msra.mxu0 0.0
    %1097 = vmatprep.subr.mxu0 0.0
    %1098 = vmatpush1.msra.mxu0 0.0
    %1099 = vmatprep.subr.mxu0 0.0
    %1100 = vmatpush1.msra.mxu0 0.0
    %1101 = vmatprep.subr.mxu0 0.0
    %1102 = vmatpush1.msra.mxu0 0.0
    %1103 = vmatprep.subr.mxu0 0.0
    %1104 = vmatpush1.msra.mxu0 0.0
    %1105 = vmatprep.subr.mxu0 0.0
    %1106 = vmatpush1.msra.mxu0 0.0
    %1107 = vmatprep.mubr.f32.mxu0 0.0
    %v1108 = vand.u32 %v1038, 4294901760
    %v1109 = vsub.f32 %v1038, %v1108
    %v1110 = vand.u32 %v1109, 4294901760
    %v1111 = vsub.f32 %v1109, %v1110
    %v1112 = vand.u32 %v1111, 4294901760
    %1113 = vmatmul.mubr.f32.gmra.mrb[0].mxu0 %v1112
    %v1114 = vpop.f32.mrb[0].mxu0
    %v1115 = vadd.f32 %v76, %v1114
    %v1116 = vpop.f32.mrb[0].mxu0
    %1117 = vdwg.mxu0
    %1118 = vmatprep.subr.mxu0 0.0
    %v1119 = vand.u32 %v65, 4294901760
    %v1120 = vsub.f32 %v65, %v1119
    %v1121 = vand.u32 %v1120, 4294901760
    %v1122 = vsub.f32 %v1120, %v1121
    %v1123 = vand.u32 %v1122, 4294901760
    %1124 = vmatpush1.msra.mxu0 %v1123
    %1125 = vmatprep.subr.mxu0 0.0
    %v1126 = vand.u32 %v66, 4294901760
    %v1127 = vsub.f32 %v66, %v1126
    %v1128 = vand.u32 %v1127, 4294901760
    %v1129 = vsub.f32 %v1127, %v1128
    %v1130 = vand.u32 %v1129, 4294901760
    %1131 = vmatpush1.msra.mxu0 %v1130
    %1132 = vmatprep.subr.mxu0 0.0
    %v1133 = vand.u32 %v84, 4294901760
    %v1134 = vsub.f32 %v84, %v1133
    %v1135 = vand.u32 %v1134, 4294901760
    %v1136 = vsub.f32 %v1134, %v1135
    %v1137 = vand.u32 %v1136, 4294901760
    %1138 = vmatpush1.msra.mxu0 %v1137
    %1139 = vmatprep.subr.mxu0 0.0
    %1140 = vmatpush1.msra.mxu0 0.0
    %1141 = vmatprep.subr.mxu0 0.0
    %1142 = vmatpush1.msra.mxu0 0.0
    %1143 = vmatprep.subr.mxu0 0.0
    %1144 = vmatpush1.msra.mxu0 0.0
    %1145 = vmatprep.subr.mxu0 0.0
    %1146 = vmatpush1.msra.mxu0 0.0
    %1147 = vmatprep.subr.mxu0 0.0
    %1148 = vmatpush1.msra.mxu0 0.0
    %1149 = vmatprep.subr.mxu0 0.0
    %1150 = vmatpush1.msra.mxu0 0.0
    %1151 = vmatprep.subr.mxu0 0.0
    %1152 = vmatpush1.msra.mxu0 0.0
    %1153 = vmatprep.subr.mxu0 0.0
    %1154 = vmatpush1.msra.mxu0 0.0
    %1155 = vmatprep.subr.mxu0 0.0
    %1156 = vmatpush1.msra.mxu0 0.0
    %1157 = vmatprep.subr.mxu0 0.0
    %1158 = vmatpush1.msra.mxu0 0.0
    %1159 = vmatprep.subr.mxu0 0.0
    %1160 = vmatpush1.msra.mxu0 0.0
    %1161 = vmatprep.subr.mxu0 0.0
    %1162 = vmatpush1.msra.mxu0 0.0
    %1163 = vmatprep.subr.mxu0 0.0
    %1164 = vmatpush1.msra.mxu0 0.0
    %1165 = vmatprep.subr.mxu0 0.0
    %1166 = vmatpush1.msra.mxu0 0.0
    %1167 = vmatprep.subr.mxu0 0.0
    %1168 = vmatpush1.msra.mxu0 0.0
    %1169 = vmatprep.subr.mxu0 0.0
    %1170 = vmatpush1.msra.mxu0 0.0
    %1171 = vmatprep.subr.mxu0 0.0
    %1172 = vmatpush1.msra.mxu0 0.0
    %1173 = vmatprep.subr.mxu0 0.0
    %1174 = vmatpush1.msra.mxu0 0.0
    %1175 = vmatprep.subr.mxu0 0.0
    %1176 = vmatpush1.msra.mxu0 0.0
    %1177 = vmatprep.subr.mxu0 0.0
    %1178 = vmatpush1.msra.mxu0 0.0
    %1179 = vmatprep.subr.mxu0 0.0
    %1180 = vmatpush1.msra.mxu0 0.0
    %1181 = vmatprep.subr.mxu0 0.0
    %1182 = vmatpush1.msra.mxu0 0.0
    %1183 = vmatprep.subr.mxu0 0.0
    %1184 = vmatpush1.msra.mxu0 0.0
    %1185 = vmatprep.subr.mxu0 0.0
    %1186 = vmatpush1.msra.mxu0 0.0
    %1187 = vmatprep.subr.mxu0 0.0
    %1188 = vmatpush1.msra.mxu0 0.0
    %1189 = vmatprep.subr.mxu0 0.0
    %1190 = vmatpush1.msra.mxu0 0.0
    %1191 = vmatprep.subr.mxu0 0.0
    %1192 = vmatpush1.msra.mxu0 0.0
    %1193 = vmatprep.subr.mxu0 0.0
    %1194 = vmatpush1.msra.mxu0 0.0
    %1195 = vmatprep.subr.mxu0 0.0
    %1196 = vmatpush1.msra.mxu0 0.0
    %1197 = vmatprep.mubr.f32.mxu0 0.0
    %v1198 = vand.u32 %v1038, 4294901760
    %1199 = vmatmul.mubr.f32.gmra.mrb[0].mxu0 %v1198
    %v1200 = vpop.f32.mrb[0].mxu0
    %v1201 = vadd.f32 %v1115, %v1200
    %v1202 = vpop.f32.mrb[0].mxu0
    %1203 = vdwg.mxu0
    %1204 = vmatprep.subr.mxu0 0.0
    %v1205 = vand.u32 %v65, 4294901760
    %v1206 = vsub.f32 %v65, %v1205
    %1207 = vmatpush1.msra.mxu0 %v1206
    %1208 = vmatprep.subr.mxu0 0.0
    %v1209 = vand.u32 %v66, 4294901760
    %v1210 = vsub.f32 %v66, %v1209
    %1211 = vmatpush1.msra.mxu0 %v1210
    %1212 = vmatprep.subr.mxu0 0.0
    %v1213 = vand.u32 %v84, 4294901760
    %v1214 = vsub.f32 %v84, %v1213
    %1215 = vmatpush1.msra.mxu0 %v1214
    %1216 = vmatprep.subr.mxu0 0.0
    %1217 = vmatpush1.msra.mxu0 0.0
    %1218 = vmatprep.subr.mxu0 0.0
    %1219 = vmatpush1.msra.mxu0 0.0
    %1220 = vmatprep.subr.mxu0 0.0
    %1221 = vmatpush1.msra.mxu0 0.0
    %1222 = vmatprep.subr.mxu0 0.0
    %1223 = vmatpush1.msra.mxu0 0.0
    %1224 = vmatprep.subr.mxu0 0.0
    %1225 = vmatpush1.msra.mxu0 0.0
    %1226 = vmatprep.subr.mxu0 0.0
    %1227 = vmatpush1.msra.mxu0 0.0
    %1228 = vmatprep.subr.mxu0 0.0
    %1229 = vmatpush1.msra.mxu0 0.0
    %1230 = vmatprep.subr.mxu0 0.0
    %1231 = vmatpush1.msra.mxu0 0.0
    %1232 = vmatprep.subr.mxu0 0.0
    %1233 = vmatpush1.msra.mxu0 0.0
    %1234 = vmatprep.subr.mxu0 0.0
    %1235 = vmatpush1.msra.mxu0 0.0
    %1236 = vmatprep.subr.mxu0 0.0
    %1237 = vmatpush1.msra.mxu0 0.0
    %1238 = vmatprep.subr.mxu0 0.0
    %1239 = vmatpush1.msra.mxu0 0.0
    %1240 = vmatprep.subr.mxu0 0.0
    %1241 = vmatpush1.msra.mxu0 0.0
    %1242 = vmatprep.subr.mxu0 0.0
    %1243 = vmatpush1.msra.mxu0 0.0
    %1244 = vmatprep.subr.mxu0 0.0
    %1245 = vmatpush1.msra.mxu0 0.0
    %1246 = vmatprep.subr.mxu0 0.0
    %1247 = vmatpush1.msra.mxu0 0.0
    %1248 = vmatprep.subr.mxu0 0.0
    %1249 = vmatpush1.msra.mxu0 0.0
    %1250 = vmatprep.subr.mxu0 0.0
    %1251 = vmatpush1.msra.mxu0 0.0
    %1252 = vmatprep.subr.mxu0 0.0
    %1253 = vmatpush1.msra.mxu0 0.0
    %1254 = vmatprep.subr.mxu0 0.0
    %1255 = vmatpush1.msra.mxu0 0.0
    %1256 = vmatprep.subr.mxu0 0.0
    %1257 = vmatpush1.msra.mxu0 0.0
    %1258 = vmatprep.subr.mxu0 0.0
    %1259 = vmatpush1.msra.mxu0 0.0
    %1260 = vmatprep.subr.mxu0 0.0
    %1261 = vmatpush1.msra.mxu0 0.0
    %1262 = vmatprep.subr.mxu0 0.0
    %1263 = vmatpush1.msra.mxu0 0.0
    %1264 = vmatprep.subr.mxu0 0.0
    %1265 = vmatpush1.msra.mxu0 0.0
    %1266 = vmatprep.subr.mxu0 0.0
    %1267 = vmatpush1.msra.mxu0 0.0
    %1268 = vmatprep.subr.mxu0 0.0
    %1269 = vmatpush1.msra.mxu0 0.0
    %1270 = vmatprep.subr.mxu0 0.0
    %1271 = vmatpush1.msra.mxu0 0.0
    %1272 = vmatprep.subr.mxu0 0.0
    %1273 = vmatpush1.msra.mxu0 0.0
    %1274 = vmatprep.mubr.f32.mxu0 0.0
    %v1275 = vand.u32 %v1038, 4294901760
    %v1276 = vsub.f32 %v1038, %v1275
    %1277 = vmatmul.mubr.f32.gmra.mrb[0].mxu0 %v1276
    %v1278 = vpop.f32.mrb[0].mxu0
    %v1279 = vadd.f32 %v1201, %v1278
    %v1280 = vpop.f32.mrb[0].mxu0
    %1281 = vdwg.mxu0
    %1282 = vmatprep.subr.mxu0 0.0
    %v1283 = vand.u32 %v65, 4294901760
    %1284 = vmatpush1.msra.mxu0 %v1283
    %1285 = vmatprep.subr.mxu0 0.0
    %v1286 = vand.u32 %v66, 4294901760
    %1287 = vmatpush1.msra.mxu0 %v1286
    %1288 = vmatprep.subr.mxu0 0.0
    %v1289 = vand.u32 %v84, 4294901760
    %1290 = vmatpush1.msra.mxu0 %v1289
    %1291 = vmatprep.subr.mxu0 0.0
    %1292 = vmatpush1.msra.mxu0 0.0
    %1293 = vmatprep.subr.mxu0 0.0
    %1294 = vmatpush1.msra.mxu0 0.0
    %1295 = vmatprep.subr.mxu0 0.0
    %1296 = vmatpush1.msra.mxu0 0.0
    %1297 = vmatprep.subr.mxu0 0.0
    %1298 = vmatpush1.msra.mxu0 0.0
    %1299 = vmatprep.subr.mxu0 0.0
    %1300 = vmatpush1.msra.mxu0 0.0
    %1301 = vmatprep.subr.mxu0 0.0
    %1302 = vmatpush1.msra.mxu0 0.0
    %1303 = vmatprep.subr.mxu0 0.0
    %1304 = vmatpush1.msra.mxu0 0.0
    %1305 = vmatprep.subr.mxu0 0.0
    %1306 = vmatpush1.msra.mxu0 0.0
    %1307 = vmatprep.subr.mxu0 0.0
    %1308 = vmatpush1.msra.mxu0 0.0
    %1309 = vmatprep.subr.mxu0 0.0
    %1310 = vmatpush1.msra.mxu0 0.0
    %1311 = vmatprep.subr.mxu0 0.0
    %1312 = vmatpush1.msra.mxu0 0.0
    %1313 = vmatprep.subr.mxu0 0.0
    %1314 = vmatpush1.msra.mxu0 0.0
    %1315 = vmatprep.subr.mxu0 0.0
    %1316 = vmatpush1.msra.mxu0 0.0
    %1317 = vmatprep.subr.mxu0 0.0
    %1318 = vmatpush1.msra.mxu0 0.0
    %1319 = vmatprep.subr.mxu0 0.0
    %1320 = vmatpush1.msra.mxu0 0.0
    %1321 = vmatprep.subr.mxu0 0.0
    %1322 = vmatpush1.msra.mxu0 0.0
    %1323 = vmatprep.subr.mxu0 0.0
    %1324 = vmatpush1.msra.mxu0 0.0
    %1325 = vmatprep.subr.mxu0 0.0
    %1326 = vmatpush1.msra.mxu0 0.0
    %1327 = vmatprep.subr.mxu0 0.0
    %1328 = vmatpush1.msra.mxu0 0.0
    %1329 = vmatprep.subr.mxu0 0.0
    %1330 = vmatpush1.msra.mxu0 0.0
    %1331 = vmatprep.subr.mxu0 0.0
    %1332 = vmatpush1.msra.mxu0 0.0
    %1333 = vmatprep.subr.mxu0 0.0
    %1334 = vmatpush1.msra.mxu0 0.0
    %1335 = vmatprep.subr.mxu0 0.0
    %1336 = vmatpush1.msra.mxu0 0.0
    %1337 = vmatprep.subr.mxu0 0.0
    %1338 = vmatpush1.msra.mxu0 0.0
    %1339 = vmatprep.subr.mxu0 0.0
    %1340 = vmatpush1.msra.mxu0 0.0
    %1341 = vmatprep.subr.mxu0 0.0
    %1342 = vmatpush1.msra.mxu0 0.0
    %1343 = vmatprep.subr.mxu0 0.0
    %1344 = vmatpush1.msra.mxu0 0.0
    %1345 = vmatprep.subr.mxu0 0.0
    %1346 = vmatpush1.msra.mxu0 0.0
    %1347 = vmatprep.subr.mxu0 0.0
    %1348 = vmatpush1.msra.mxu0 0.0
    %1349 = vmatprep.mubr.f32.mxu0 0.0
    %v1350 = vand.u32 %v1038, 4294901760
    %v1351 = vsub.f32 %v1038, %v1350
    %v1352 = vand.u32 %v1351, 4294901760
    %1353 = vmatmul.mubr.f32.gmra.mrb[0].mxu0 %v1352
    %v1354 = vpop.f32.mrb[0].mxu0
    %v1355 = vadd.f32 %v1279, %v1354
    %v1356 = vpop.f32.mrb[0].mxu0
    %1357 = vdwg.mxu0
    %1358 = vmatprep.subr.mxu0 0.0
    %v1359 = vand.u32 %v65, 4294901760
    %v1360 = vsub.f32 %v65, %v1359
    %v1361 = vand.u32 %v1360, 4294901760
    %1362 = vmatpush1.msra.mxu0 %v1361
    %1363 = vmatprep.subr.mxu0 0.0
    %v1364 = vand.u32 %v66, 4294901760
    %v1365 = vsub.f32 %v66, %v1364
    %v1366 = vand.u32 %v1365, 4294901760
    %1367 = vmatpush1.msra.mxu0 %v1366
    %1368 = vmatprep.subr.mxu0 0.0
    %v1369 = vand.u32 %v84, 4294901760
    %v1370 = vsub.f32 %v84, %v1369
    %v1371 = vand.u32 %v1370, 4294901760
    %1372 = vmatpush1.msra.mxu0 %v1371
    %1373 = vmatprep.subr.mxu0 0.0
    %1374 = vmatpush1.msra.mxu0 0.0
    %1375 = vmatprep.subr.mxu0 0.0
    %1376 = vmatpush1.msra.mxu0 0.0
    %1377 = vmatprep.subr.mxu0 0.0
    %1378 = vmatpush1.msra.mxu0 0.0
    %1379 = vmatprep.subr.mxu0 0.0
    %1380 = vmatpush1.msra.mxu0 0.0
    %1381 = vmatprep.subr.mxu0 0.0
    %1382 = vmatpush1.msra.mxu0 0.0
    %1383 = vmatprep.subr.mxu0 0.0
    %1384 = vmatpush1.msra.mxu0 0.0
    %1385 = vmatprep.subr.mxu0 0.0
    %1386 = vmatpush1.msra.mxu0 0.0
    %1387 = vmatprep.subr.mxu0 0.0
    %1388 = vmatpush1.msra.mxu0 0.0
    %1389 = vmatprep.subr.mxu0 0.0
    %1390 = vmatpush1.msra.mxu0 0.0
    %1391 = vmatprep.subr.mxu0 0.0
    %1392 = vmatpush1.msra.mxu0 0.0
    %1393 = vmatprep.subr.mxu0 0.0
    %1394 = vmatpush1.msra.mxu0 0.0
    %1395 = vmatprep.subr.mxu0 0.0
    %1396 = vmatpush1.msra.mxu0 0.0
    %1397 = vmatprep.subr.mxu0 0.0
    %1398 = vmatpush1.msra.mxu0 0.0
    %1399 = vmatprep.subr.mxu0 0.0
    %1400 = vmatpush1.msra.mxu0 0.0
    %1401 = vmatprep.subr.mxu0 0.0
    %1402 = vmatpush1.msra.mxu0 0.0
    %1403 = vmatprep.subr.mxu0 0.0
    %1404 = vmatpush1.msra.mxu0 0.0
    %1405 = vmatprep.subr.mxu0 0.0
    %1406 = vmatpush1.msra.mxu0 0.0
    %1407 = vmatprep.subr.mxu0 0.0
    %1408 = vmatpush1.msra.mxu0 0.0
    %1409 = vmatprep.subr.mxu0 0.0
    %1410 = vmatpush1.msra.mxu0 0.0
    %1411 = vmatprep.subr.mxu0 0.0
    %1412 = vmatpush1.msra.mxu0 0.0
    %1413 = vmatprep.subr.mxu0 0.0
    %1414 = vmatpush1.msra.mxu0 0.0
    %1415 = vmatprep.subr.mxu0 0.0
    %1416 = vmatpush1.msra.mxu0 0.0
    %1417 = vmatprep.subr.mxu0 0.0
    %1418 = vmatpush1.msra.mxu0 0.0
    %1419 = vmatprep.subr.mxu0 0.0
    %1420 = vmatpush1.msra.mxu0 0.0
    %1421 = vmatprep.subr.mxu0 0.0
    %1422 = vmatpush1.msra.mxu0 0.0
    %1423 = vmatprep.subr.mxu0 0.0
    %1424 = vmatpush1.msra.mxu0 0.0
    %1425 = vmatprep.subr.mxu0 0.0
    %1426 = vmatpush1.msra.mxu0 0.0
    %1427 = vmatprep.subr.mxu0 0.0
    %1428 = vmatpush1.msra.mxu0 0.0
    %1429 = vmatprep.subr.mxu0 0.0
    %1430 = vmatpush1.msra.mxu0 0.0
    %1431 = vmatprep.mubr.f32.mxu0 0.0
    %v1432 = vand.u32 %v1038, 4294901760
    %1433 = vmatmul.mubr.f32.gmra.mrb[0].mxu0 %v1432
    %v1434 = vpop.f32.mrb[0].mxu0
    %v1435 = vadd.f32 %v1355, %v1434
    %v1436 = vpop.f32.mrb[0].mxu0
    %1437 = vdwg.mxu0
    %1438 = vmatprep.subr.mxu0 0.0
    %v1439 = vand.u32 %v65, 4294901760
    %1440 = vmatpush1.msra.mxu0 %v1439
    %1441 = vmatprep.subr.mxu0 0.0
    %v1442 = vand.u32 %v66, 4294901760
    %1443 = vmatpush1.msra.mxu0 %v1442
    %1444 = vmatprep.subr.mxu0 0.0
    %v1445 = vand.u32 %v84, 4294901760
    %1446 = vmatpush1.msra.mxu0 %v1445
    %1447 = vmatprep.subr.mxu0 0.0
    %1448 = vmatpush1.msra.mxu0 0.0
    %1449 = vmatprep.subr.mxu0 0.0
    %1450 = vmatpush1.msra.mxu0 0.0
    %1451 = vmatprep.subr.mxu0 0.0
    %1452 = vmatpush1.msra.mxu0 0.0
    %1453 = vmatprep.subr.mxu0 0.0
    %1454 = vmatpush1.msra.mxu0 0.0
    %1455 = vmatprep.subr.mxu0 0.0
    %1456 = vmatpush1.msra.mxu0 0.0
    %1457 = vmatprep.subr.mxu0 0.0
    %1458 = vmatpush1.msra.mxu0 0.0
    %1459 = vmatprep.subr.mxu0 0.0
    %1460 = vmatpush1.msra.mxu0 0.0
    %1461 = vmatprep.subr.mxu0 0.0
    %1462 = vmatpush1.msra.mxu0 0.0
    %1463 = vmatprep.subr.mxu0 0.0
    %1464 = vmatpush1.msra.mxu0 0.0
    %1465 = vmatprep.subr.mxu0 0.0
    %1466 = vmatpush1.msra.mxu0 0.0
    %1467 = vmatprep.subr.mxu0 0.0
    %1468 = vmatpush1.msra.mxu0 0.0
    %1469 = vmatprep.subr.mxu0 0.0
    %1470 = vmatpush1.msra.mxu0 0.0
    %1471 = vmatprep.subr.mxu0 0.0
    %1472 = vmatpush1.msra.mxu0 0.0
    %1473 = vmatprep.subr.mxu0 0.0
    %1474 = vmatpush1.msra.mxu0 0.0
    %1475 = vmatprep.subr.mxu0 0.0
    %1476 = vmatpush1.msra.mxu0 0.0
    %1477 = vmatprep.subr.mxu0 0.0
    %1478 = vmatpush1.msra.mxu0 0.0
    %1479 = vmatprep.subr.mxu0 0.0
    %1480 = vmatpush1.msra.mxu0 0.0
    %1481 = vmatprep.subr.mxu0 0.0
    %1482 = vmatpush1.msra.mxu0 0.0
    %1483 = vmatprep.subr.mxu0 0.0
    %1484 = vmatpush1.msra.mxu0 0.0
    %1485 = vmatprep.subr.mxu0 0.0
    %1486 = vmatpush1.msra.mxu0 0.0
    %1487 = vmatprep.subr.mxu0 0.0
    %1488 = vmatpush1.msra.mxu0 0.0
    %1489 = vmatprep.subr.mxu0 0.0
    %1490 = vmatpush1.msra.mxu0 0.0
    %1491 = vmatprep.subr.mxu0 0.0
    %1492 = vmatpush1.msra.mxu0 0.0
    %1493 = vmatprep.subr.mxu0 0.0
    %1494 = vmatpush1.msra.mxu0 0.0
    %1495 = vmatprep.subr.mxu0 0.0
    %1496 = vmatpush1.msra.mxu0 0.0
    %1497 = vmatprep.subr.mxu0 0.0
    %1498 = vmatpush1.msra.mxu0 0.0
    %1499 = vmatprep.subr.mxu0 0.0
    %1500 = vmatpush1.msra.mxu0 0.0
    %1501 = vmatprep.subr.mxu0 0.0
    %1502 = vmatpush1.msra.mxu0 0.0
    %1503 = vmatprep.subr.mxu0 0.0
    %1504 = vmatpush1.msra.mxu0 0.0
    %1505 = vmatprep.mubr.f32.mxu0 0.0
    %v1506 = vand.u32 %v1038, 4294901760
    %1507 = vmatmul.mubr.f32.gmra.mrb[0].mxu0 %v1506
    %v1508 = vpop.f32.mrb[0].mxu0
    %v1509 = vadd.f32 %v1435, %v1508
    %v1510 = vpop.f32.mrb[0].mxu0
    %1511 = vdwg.mxu0
    %v1512 = vld [vmem:[#allocation2] sm:$0x1]
    %vm1513 = vcmask 156672
    %v1514 = vsel %vm1513, %v1509, 0.0
    %1515 = vadd.xlane.f32.xlu0 %v1514
    %v1516 = vpop.xlane.xlu0 %1515
    %v1517 = vrot.slane %v1516, 4
    %v1518 = vadd.f32 %v1516, %v1517
    %v1519 = vrot.slane %v1518, 2
    %v1520 = vadd.f32 %v1518, %v1519
    %v1521 = vrot.slane %v1520, 1
    %v1522 = vadd.f32 %v1520, %v1521
    %s1523 = vtos %v1522
    %v1524 = vstv %s1523
    %v1525 = vadd.f32 %v1512, %v1524
    %vm1526 = vcmask 0
    %1527 = vst.msk [vmem:[#allocation2] sm:$0x1] %vm1526, %v1525
    %v1528 = vld [vmem:[#allocation3] sm:$0x1]
    %v1529 = vmul.f32 %v1509, %v1509
    %v1530 = vsel %vm1513, %v1529, 0.0
    %1531 = vadd.xlane.f32.xlu0 %v1530
    %v1532 = vpop.xlane.xlu0 %1531
    %v1533 = vrot.slane %v1532, 4
    %v1534 = vadd.f32 %v1532, %v1533
    %v1535 = vrot.slane %v1534, 2
    %v1536 = vadd.f32 %v1534, %v1535
    %v1537 = vrot.slane %v1536, 1
    %v1538 = vadd.f32 %v1536, %v1537
    %s1539 = vtos %v1538
    %v1540 = vstv %s1539
    %v1541 = vadd.f32 %v1528, %v1540
    %1542 = vst.msk [vmem:[#allocation3] sm:$0x1] %vm1526, %v1541
    // Predicated region
    $region34: #{fancy_mlp.1} parent=1 // pred_check
      %p1543 = pneg %p57
    $region35: #{fancy_mlp.1} parent=1 // pred_check_branch
      %1545 = sbr.rel (%p1543) target = $region37
    $region36: #{fancy_mlp.1} parent=1 // pred_region
      %v1546 = vld [vmem:[#allocation2] sm:$0x1]
      %v1547 = vld [vmem:[#allocation3] sm:$0x1]
      %v1548 = vrsqrt.pop %v1547
      %v1549 = vmul.f32 %v1547, %v1548
      %vm1550 = vcmp.eq.f32.partialorder %v1547, inf
      %v1551 = vsel %vm1550, %v1547, %v1549
      %vm1552 = vcmp.eq.f32.partialorder %v1547, 0.0
      %v1553 = vand.u32 %v1547, 2147483648
      %v1554 = vsel %vm1552, %v1553, %v1551
      %v1555 = vmax.f32 %v1554, 1.0
      %v1556 = vlog2.pop %v1555
      %v1557 = vmul.f32 %v1556, 0.6931472
      %v1558 = vrcp.pop 0.6931472
      %v1559 = vmul.f32 %v1557, %v1558
      %v1560 = vceil.f32 %v1559
      %v1561 = vmax.f32 %v1560, 0.0
      %v1562 = vsub.f32 0.0, %v1561
      %v1563 = vpow.pop %v1562
      %v1564 = vmul.f32 %v1554, %v1563
      %vm1565 = vcmp.gt.f32.partialorder %v1564, 1.0
      %v1566 = vadd.f32 %v1561, 1.0
      %v1567 = vsel %vm1565, %v1566, %v1561
      %vm1568 = vcmp.gt.f32.partialorder %v1567, 0.0
      %v1569 = vsub.f32 %v1567, 1.0
      %v1570 = vsub.f32 0.0, %v1569
      %v1571 = vpow.pop %v1570
      %v1572 = vmul.f32 %v1554, %v1571
      %vm1573 = vcmp.le.f32.partialorder %v1572, 1.0
      %vm1574 = vmand %vm1568, %vm1573
      %v1575 = vsel %vm1574, %v1569, %v1567
      %v1576 = vsub.f32 0.0, %v1575
      %v1577 = vpow.pop %v1576
      %v1578 = vmul.f32 %v1546, %v1577
      %1579 = vst.msk [vmem:[#allocation10] sm:$0x1] %vm1526, %v1578
    $region37: #{fancy_mlp.1} parent=1 // pred_fallthru
      _
    // Predicated region
    $region38: #{fancy_mlp.1} parent=1 // pred_check
      _
    $region39: #{fancy_mlp.1} parent=1 // pred_check_branch
      %1581 = sbr.rel (0) target = $region41
    $region40: #{fancy_mlp.1} parent=1 // pred_region
      %s1583 = ssub.s32 16, 16
      %1584 = vsyncadd [#allocation6], %s1583
      %s1586 = sshll.u32 [#allocation10], 4
      %s1587 = int_to_ptr.vmem [resolvable:$true] %s1586
      %1589 = dma.vmem_to_hbm [thread:$0]  %s1587, 16, %s4, [#allocation6]
    $region41: #{fancy_mlp.1} parent=1 // pred_fallthru
      _
    // Predicated region
    $region42: #{fancy_mlp.1} parent=1 // pred_check
      _
    $region43: #{fancy_mlp.1} parent=1 // pred_check_branch
      %1591 = sbr.rel (0) target = $region45
    $region44: #{fancy_mlp.1} parent=1 // pred_region
      %1592 = dma.done [#allocation6], 16
    $region45: #{fancy_mlp.1} parent=1 // pred_fallthru
      _
    %1593 = vsyncpa [#allocation5], 1
    %1594 = vsyncpa [#allocation8], 1
    %1595 = vsyncpa [#allocation6], 1

</llo_original>
